<compile_context>
chip_gen: v6e
topology: v6e:2x2x1
jax: 0.10.0
libtpu: 0.0.40
codegen_flags: <defaults>
</compile_context>

<pallas_src>
import functools

import numpy as np
import jax
import jax.numpy as jnp
from jax.experimental import pallas as pl
from jax.experimental.pallas import tpu as pltpu

EPS = 1e-6
GEM_P = 3.0
_LANE = 128
_SUBLANE = 8


def _cdiv(a, b):
    return -(-a // b)


def _round_up(a, b):
    return _cdiv(a, b) * b


# ------------------------------- fused kernel -------------------------------

def _fused_retrieval_kernel(
        x_ref, xl_ref, xr_ref,        # input tile + left/right halo: (1, Cin_p, .)
        m_ref, ml_ref, mr_ref,        # interior mask tile + halos:   (1, .)
        w1_ref, b1_ref,               # conv1: (C1, 9*Cin_p), (C1, 1)
        w2_ref, b2_ref,               # conv2: (C2, 9*C1),    (C2, 1)
        ww_ref, wb_ref,               # whiten: (D, C2),      (D, 1)
        o_ref,                        # (D, N) output == o.permute(1, 0)
        acc_ref,                      # (C2, N) f32 GeM accumulator (VMEM scratch)
        *, taps, ts, halo1, n_img, hw_inv, mm_dtype):
    img = pl.program_id(0)
    s = pl.program_id(1)
    halo = 2 * halo1
    w1len = ts + 2 * halo1            # width over which conv1 is evaluated

    @pl.when((img == 0) & (s == 0))
    def _init():
        acc_ref[...] = jnp.zeros_like(acc_ref)

    # Input window (Cin_p, TS + 2*HALO) and interior-mask window (1, TS + 2*HALO).
    win = jnp.concatenate([xl_ref[0], x_ref[0], xr_ref[0]],
                          axis=-1).astype(jnp.float32)
    mwin = jnp.concatenate([ml_ref[...], m_ref[...], mr_ref[...]], axis=-1)

    # ---- conv1: fused-K im2col + ONE MXU contraction + bias + ReLU + mask ------
    # tap (di, dj) of a 3x3/pad-1 conv == a static lane shift of the flat grid.
    stk1 = jnp.concatenate([win[:, off:off + w1len] for off in taps],
                           axis=0).astype(mm_dtype)                    # (9*Cin_p, W1)
    y1 = jnp.dot(w1_ref[...], stk1, preferred_element_type=jnp.float32)
    y1 = jnp.maximum(y1 + b1_ref[...], 0.0) * mwin[:, halo1:halo1 + w1len]
    y1 = y1.astype(mm_dtype)                                           # (C1, W1)

    # ---- conv2 on the VMEM-resident conv1 tile (never leaves the chip) ---------
    stk2 = jnp.concatenate([y1[:, off:off + ts] for off in taps], axis=0)
    y2 = jnp.dot(w2_ref[...], stk2, preferred_element_type=jnp.float32)
    y2 = jnp.maximum(y2 + b2_ref[...], 0.0)                            # (C2, TS)

    # ---- GeM partial sum over this tile's interior columns (f32) ---------------
    xc = jnp.maximum(y2, EPS)
    cube = (xc * xc * xc) * mwin[:, halo:halo + ts]
    psum = jnp.sum(cube, axis=-1, keepdims=True)                       # (C2, 1)
    onehot = (jax.lax.broadcasted_iota(jnp.int32, (1, n_img), 1) == img)
    acc_ref[...] += psum * onehot.astype(jnp.float32)

    # ---- last grid step: GeM root + L2N + whiten + L2N -> (D, N) ---------------
    @pl.when((img == pl.num_programs(0) - 1) & (s == pl.num_programs(1) - 1))
    def _head():
        pooled = jnp.exp(jnp.log(acc_ref[...] * hw_inv) * (1.0 / GEM_P))   # (C2, N)
        pooled = pooled / (jnp.sqrt(jnp.sum(pooled * pooled, axis=0,
                                            keepdims=True)) + EPS)
        y = jnp.dot(ww_ref[...], pooled,
                    preferred_element_type=jnp.float32) + wb_ref[...]      # (D, N)
        o_ref[...] = (y / (jnp.sqrt(jnp.sum(y * y, axis=0,
                                            keepdims=True)) + EPS)).astype(o_ref.dtype)


# ------------------------------- wrapper ------------------------------------

def _conv_w_mat(wt, cin_pad):
    """(Cout, Cin, 3, 3) -> (Cout, 9*Cin_pad), rows ordered tap-major then channel."""
    co, ci, kh, kw = wt.shape
    wm = jnp.transpose(wt, (0, 2, 3, 1))                 # (Cout, 3, 3, Cin)
    if cin_pad > ci:
        wm = jnp.pad(wm, ((0, 0), (0, 0), (0, 0), (0, cin_pad - ci)))
    return wm.reshape(co, kh * kw * cin_pad)


def image_retrieval_net_forward(x, params, *, mm_dtype=jnp.bfloat16,
                                ts_cap_hint=4096):
    n_img, cin, h, w = x.shape
    c1 = params["conv1_w"].shape[0]
    c2 = params["conv2_w"].shape[0]
    d = params["whiten_w"].shape[0]
    hp, wp = h + 2, w + 2
    s_img = hp * wp                                      # per-image padded-grid length
    cin_p = _round_up(cin, _SUBLANE)

    halo1 = _round_up(wp + 1, _LANE)                     # one-conv reach, lane aligned
    halo = 2 * halo1                                     # two-conv (5x5 effective) reach
    ts_cap = _round_up(ts_cap_hint, halo)
    ts = min(_round_up(s_img, halo), ts_cap)             # spatial tile, multiple of halo
    ns = _cdiv(s_img, ts)
    s_pad = ns * ts
    s_total = s_pad + 2 * ts                             # TS-wide zero guards both sides
    rb = ts // halo                                      # halo blocks per tile

    # Input -> zero-padded grid, per-image flat layout with zero guards (bf16 in HBM).
    xpad = jnp.pad(x, ((0, 0), (0, 0), (1, 1), (1, 1)))              # (N, C, Hp, Wp)
    xin = xpad.reshape(n_img, cin, s_img)
    xin = jnp.pad(xin, ((0, 0), (0, cin_p - cin), (ts, s_total - ts - s_img)))
    xin = xin.astype(mm_dtype)                                        # (N, Cin_p, S_total)

    # Interior mask (identical for every image), same guard layout as xin.
    j = np.arange(s_pad)
    row, col = j // wp, j % wp
    interior = (j < s_img) & (row >= 1) & (row <= h) & (col >= 1) & (col <= w)
    m_np = np.zeros((1, s_total), np.float32)
    m_np[0, ts:ts + s_pad] = interior.astype(np.float32)
    mask = jnp.asarray(m_np)

    # Static lane shifts of the 9 taps (same offsets serve both convs).
    taps = tuple(halo1 - (wp + 1) + di * wp + dj
                 for di in range(3) for dj in range(3))

    w1m = _conv_w_mat(params["conv1_w"], cin_p).astype(mm_dtype)      # (C1, 9*Cin_p)
    w2m = _conv_w_mat(params["conv2_w"], c1).astype(mm_dtype)         # (C2, 9*C1)
    b1 = params["conv1_b"].reshape(c1, 1).astype(jnp.float32)
    b2 = params["conv2_b"].reshape(c2, 1).astype(jnp.float32)
    ww = params["whiten_w"].astype(jnp.float32)
    wb = params["whiten_b"].reshape(d, 1).astype(jnp.float32)

    kernel = functools.partial(
        _fused_retrieval_kernel, taps=taps, ts=ts, halo1=halo1,
        n_img=n_img, hw_inv=1.0 / float(h * w), mm_dtype=mm_dtype)

    itemsize = jnp.dtype(mm_dtype).itemsize
    flops = n_img * ns * 2 * (c1 * 9 * cin_p * (ts + 2 * halo1) + c2 * 9 * c1 * ts)
    bytes_acc = (n_img * ns * ((ts + 2 * halo) * (cin_p * itemsize + 4))
                 + (w1m.size + w2m.size) * itemsize
                 + 4 * (c1 + c2 + d * c2 + d + d * n_img))

    return pl.pallas_call(
        kernel,
        out_shape=jax.ShapeDtypeStruct((d, n_img), jnp.float32),
        grid=(n_img, ns),
        in_specs=[
            # input: main tile + left/right halo (same array, three DMA streams)
            pl.BlockSpec((1, cin_p, ts), lambda i, s: (i, 0, s + 1)),
            pl.BlockSpec((1, cin_p, halo), lambda i, s: (i, 0, (s + 1) * rb - 1)),
            pl.BlockSpec((1, cin_p, halo), lambda i, s: (i, 0, (s + 2) * rb)),
            # interior mask: main tile + halos (image independent)
            pl.BlockSpec((1, ts), lambda i, s: (0, s + 1)),
            pl.BlockSpec((1, halo), lambda i, s: (0, (s + 1) * rb - 1)),
            pl.BlockSpec((1, halo), lambda i, s: (0, (s + 2) * rb)),
            # weights / biases (tiny, resident)
            pl.BlockSpec(w1m.shape, lambda i, s: (0, 0)),
            pl.BlockSpec(b1.shape, lambda i, s: (0, 0)),
            pl.BlockSpec(w2m.shape, lambda i, s: (0, 0)),
            pl.BlockSpec(b2.shape, lambda i, s: (0, 0)),
            pl.BlockSpec(ww.shape, lambda i, s: (0, 0)),
            pl.BlockSpec(wb.shape, lambda i, s: (0, 0)),
        ],
        out_specs=pl.BlockSpec((d, n_img), lambda i, s: (0, 0)),
        scratch_shapes=[pltpu.VMEM((c2, n_img), jnp.float32)],
        compiler_params=pltpu.CompilerParams(
            # Shared GeM accumulator + last-step head => sequential grid.
            dimension_semantics=("arbitrary", "arbitrary")),
        cost_estimate=pl.CostEstimate(
            flops=flops, transcendentals=4 * c2 * n_img,
            bytes_accessed=bytes_acc),
    )(xin, xin, xin, mask, mask, mask, w1m, b1, w2m, b2, ww, wb)


# ------------------------------ reference & test ----------------------------

def _reference_forward(x, params):
    """Plain-XLA reference with PyTorch semantics (self-test only)."""
    dn = ("NCHW", "OIHW", "NCHW")
    hi = jax.lax.Precision.HIGHEST
    o = jax.lax.conv_general_dilated(x, params["conv1_w"], (1, 1), ((1, 1), (1, 1)),
                                     dimension_numbers=dn, precision=hi)
    o = jnp.maximum(o + params["conv1_b"][None, :, None, None], 0.0)
    o = jax.lax.conv_general_dilated(o, params["conv2_w"], (1, 1), ((1, 1), (1, 1)),
                                     dimension_numbers=dn, precision=hi)
    o = jnp.maximum(o + params["conv2_b"][None, :, None, None], 0.0)
    pooled = jnp.mean(jnp.maximum(o, EPS) ** GEM_P, axis=(2, 3)) ** (1.0 / GEM_P)
    pooled = pooled / (jnp.linalg.norm(pooled, axis=1, keepdims=True) + EPS)
    y = pooled @ params["whiten_w"].T + params["whiten_b"][None, :]
    y = y / (jnp.linalg.norm(y, axis=1, keepdims=True) + EPS)
    return y.T                                            # (outputdim, batch)


def init_params(key, cin=4, c1=32, c2=32, outdim=32):
    ks = jax.random.split(key, 6)
    return {
        "conv1_w": jax.random.normal(ks[0], (c1, cin, 3, 3), jnp.float32) * 0.1,
        "conv1_b": jax.random.normal(ks[1], (c1,), jnp.float32) * 0.01,
        "conv2_w": jax.random.normal(ks[2], (c2, c1, 3, 3), jnp.float32) * 0.1,
        "conv2_b": jax.random.normal(ks[3], (c2,), jnp.float32) * 0.01,
        "whiten_w": jax.random.normal(ks[4], (outdim, c2), jnp.float32) * 0.1,
        "whiten_b": jax.random.normal(ks[5], (outdim,), jnp.float32) * 0.01,
    }


if __name__ == "__main__":
    key = jax.random.PRNGKey(0)
    kx, kp = jax.random.split(key)
    x = jax.random.normal(kx, (2, 4, 16, 16), jnp.float32)   # NCHW, like PyTorch
    params = init_params(kp)

    fwd = jax.jit(lambda xx: image_retrieval_net_forward(xx, params))
    out = jax.block_until_ready(fwd(x))

    assert out.shape == (32, 2), out.shape                   # (outputdim, batch)
    # Each column (per-image descriptor) must be unit norm after the final L2N.
    norms = jnp.sqrt(jnp.sum(out * out, axis=0))
    assert bool(jnp.all(jnp.abs(norms - 1.0) < 1e-3)), norms
    # Cross-check against the plain-XLA f32 reference (tolerance covers bf16 MXU
    # inputs; accumulation / GeM / L2N are kept in f32 inside the kernel).
    ref = _reference_forward(x, params)
    err = float(jnp.max(jnp.abs(out - ref)))
    assert err < 3e-2, err
    print("KERNEL_OK")
</pallas_src>

<mosaic_0001>
module attributes {stable_mosaic.version = 11 : i64} {
  func.func @_fused_retrieval_kernel(%arg0: i32, %arg1: i32, %arg2: memref<1x8x512xbf16, #tpu.memory_space<vmem>>, %arg3: memref<1x8x256xbf16, #tpu.memory_space<vmem>>, %arg4: memref<1x8x256xbf16, #tpu.memory_space<vmem>>, %arg5: memref<1x512xf32, #tpu.memory_space<vmem>>, %arg6: memref<1x256xf32, #tpu.memory_space<vmem>>, %arg7: memref<1x256xf32, #tpu.memory_space<vmem>>, %arg8: memref<32x72xbf16, #tpu.memory_space<vmem>>, %arg9: memref<32x1xf32, #tpu.memory_space<vmem>>, %arg10: memref<32x288xbf16, #tpu.memory_space<vmem>>, %arg11: memref<32x1xf32, #tpu.memory_space<vmem>>, %arg12: memref<32x32xf32, #tpu.memory_space<vmem>>, %arg13: memref<32x1xf32, #tpu.memory_space<vmem>>, %arg14: memref<32x2xf32, #tpu.memory_space<vmem>>, %arg15: memref<32x2xf32, #tpu.memory_space<vmem>>) attributes {dimension_semantics = [#tpu.dimension_semantics<arbitrary>, #tpu.dimension_semantics<arbitrary>], iteration_bounds = array<i64: 2, 1>, scalar_prefetch = 0 : i64, scratch_operands = 1 : i64, tpu.core_type = #tpu.core_type<tc>, window_params = [{transform_indices = @transform_0, window_bounds = array<i64: 1, 8, 512>}, {transform_indices = @transform_1, window_bounds = array<i64: 1, 8, 256>}, {transform_indices = @transform_2, window_bounds = array<i64: 1, 8, 256>}, {transform_indices = @transform_3, window_bounds = array<i64: 1, 512>}, {transform_indices = @transform_4, window_bounds = array<i64: 1, 256>}, {transform_indices = @transform_5, window_bounds = array<i64: 1, 256>}, {pipeline_mode = #tpu.pipeline_mode<synchronous>, transform_indices = @transform_6, window_bounds = array<i64: 32, 72>}, {pipeline_mode = #tpu.pipeline_mode<synchronous>, transform_indices = @transform_7, window_bounds = array<i64: 32, 1>}, {pipeline_mode = #tpu.pipeline_mode<synchronous>, transform_indices = @transform_8, window_bounds = array<i64: 32, 288>}, {pipeline_mode = #tpu.pipeline_mode<synchronous>, transform_indices = @transform_9, window_bounds = array<i64: 32, 1>}, {pipeline_mode = #tpu.pipeline_mode<synchronous>, transform_indices = @transform_10, window_bounds = array<i64: 32, 32>}, {pipeline_mode = #tpu.pipeline_mode<synchronous>, transform_indices = @transform_11, window_bounds = array<i64: 32, 1>}, {pipeline_mode = #tpu.pipeline_mode<synchronous>, transform_indices = @transform_12, window_bounds = array<i64: 32, 2>}]} {
    %c0_i32 = arith.constant 0 : i32
    %0 = arith.cmpi eq, %arg0, %c0_i32 : i32
    %c0_i32_0 = arith.constant 0 : i32
    %1 = arith.cmpi eq, %arg1, %c0_i32_0 : i32
    %2 = arith.andi %0, %1 : i1
    %3 = arith.extui %2 : i1 to i32
    %c0_i32_1 = arith.constant 0 : i32
    %4 = arith.cmpi ne, %3, %c0_i32_1 : i32
    scf.if %4 {
      %cst_35 = arith.constant 0.000000e+00 : f32
      %81 = vector.broadcast %cst_35 : f32 to vector<32x2xf32>
      %c0_36 = arith.constant 0 : index
      %c0_37 = arith.constant 0 : index
      %82 = vector.load %arg15[%c0_36, %c0_37] : memref<32x2xf32, #tpu.memory_space<vmem>>, vector<32x2xf32>
      tpu.vector_store %arg15[%c0_36, %c0_37], %81 {strides = array<i32>} : memref<32x2xf32, #tpu.memory_space<vmem>>, vector<32x2xf32>,
    } else {
    }
    %c0 = arith.constant 0 : index
    %c0_2 = arith.constant 0 : index
    %c0_3 = arith.constant 0 : index
    %5 = vector.load %arg3[%c0, %c0_2, %c0_3] : memref<1x8x256xbf16, #tpu.memory_space<vmem>>, vector<1x8x256xbf16>
    %6 = vector.shape_cast %5 : vector<1x8x256xbf16> to vector<8x256xbf16>
    %c0_4 = arith.constant 0 : index
    %c0_5 = arith.constant 0 : index
    %c0_6 = arith.constant 0 : index
    %7 = vector.load %arg2[%c0_4, %c0_5, %c0_6] : memref<1x8x512xbf16, #tpu.memory_space<vmem>>, vector<1x8x512xbf16>
    %8 = vector.shape_cast %7 : vector<1x8x512xbf16> to vector<8x512xbf16>
    %c0_7 = arith.constant 0 : index
    %c0_8 = arith.constant 0 : index
    %c0_9 = arith.constant 0 : index
    %9 = vector.load %arg4[%c0_7, %c0_8, %c0_9] : memref<1x8x256xbf16, #tpu.memory_space<vmem>>, vector<1x8x256xbf16>
    %10 = vector.shape_cast %9 : vector<1x8x256xbf16> to vector<8x256xbf16>
    %11 = tpu.concatenate %6, %8, %10 in 1 : vector<8x256xbf16>, vector<8x512xbf16>, vector<8x256xbf16> -> vector<8x1024xbf16>
    %12 = arith.extf %11 : vector<8x1024xbf16> to vector<8x1024xf32>
    %c0_10 = arith.constant 0 : index
    %c0_11 = arith.constant 0 : index
    %13 = vector.load %arg6[%c0_10, %c0_11] : memref<1x256xf32, #tpu.memory_space<vmem>>, vector<1x256xf32>
    %c0_12 = arith.constant 0 : index
    %c0_13 = arith.constant 0 : index
    %14 = vector.load %arg5[%c0_12, %c0_13] : memref<1x512xf32, #tpu.memory_space<vmem>>, vector<1x512xf32>
    %c0_14 = arith.constant 0 : index
    %c0_15 = arith.constant 0 : index
    %15 = vector.load %arg7[%c0_14, %c0_15] : memref<1x256xf32, #tpu.memory_space<vmem>>, vector<1x256xf32>
    %16 = tpu.concatenate %13, %14, %15 in 1 : vector<1x256xf32>, vector<1x512xf32>, vector<1x256xf32> -> vector<1x1024xf32>
    %17 = vector.extract_strided_slice %12 {offsets = [0, 109], sizes = [8, 768], strides = [1, 1]} : vector<8x1024xf32> to vector<8x768xf32>
    %18 = vector.extract_strided_slice %12 {offsets = [0, 110], sizes = [8, 768], strides = [1, 1]} : vector<8x1024xf32> to vector<8x768xf32>
    %19 = vector.extract_strided_slice %12 {offsets = [0, 111], sizes = [8, 768], strides = [1, 1]} : vector<8x1024xf32> to vector<8x768xf32>
    %20 = vector.extract_strided_slice %12 {offsets = [0, 127], sizes = [8, 768], strides = [1, 1]} : vector<8x1024xf32> to vector<8x768xf32>
    %21 = vector.extract_strided_slice %12 {offsets = [0, 128], sizes = [8, 768], strides = [1, 1]} : vector<8x1024xf32> to vector<8x768xf32>
    %22 = vector.extract_strided_slice %12 {offsets = [0, 129], sizes = [8, 768], strides = [1, 1]} : vector<8x1024xf32> to vector<8x768xf32>
    %23 = vector.extract_strided_slice %12 {offsets = [0, 145], sizes = [8, 768], strides = [1, 1]} : vector<8x1024xf32> to vector<8x768xf32>
    %24 = vector.extract_strided_slice %12 {offsets = [0, 146], sizes = [8, 768], strides = [1, 1]} : vector<8x1024xf32> to vector<8x768xf32>
    %25 = vector.extract_strided_slice %12 {offsets = [0, 147], sizes = [8, 768], strides = [1, 1]} : vector<8x1024xf32> to vector<8x768xf32>
    %26 = tpu.concatenate %17, %18, %19, %20, %21, %22, %23, %24, %25 in 0 : vector<8x768xf32>, vector<8x768xf32>, vector<8x768xf32>, vector<8x768xf32>, vector<8x768xf32>, vector<8x768xf32>, vector<8x768xf32>, vector<8x768xf32>, vector<8x768xf32> -> vector<72x768xf32>
    %27 = arith.truncf %26 : vector<72x768xf32> to vector<72x768xbf16>
    %c0_16 = arith.constant 0 : index
    %c0_17 = arith.constant 0 : index
    %28 = vector.load %arg8[%c0_16, %c0_17] : memref<32x72xbf16, #tpu.memory_space<vmem>>, vector<32x72xbf16>
    %cst = arith.constant dense<0.000000e+00> : vector<32x768xf32>
    %29 = tpu.matmul %28, %27, %cst {dimension_numbers = #tpu.dot_dimension_numbers<[1], [0], [0], [1], [0, 0, 1, 1], [], []>} : vector<32x72xbf16>, vector<72x768xbf16>, vector<32x768xf32> -> vector<32x768xf32>
    %c0_18 = arith.constant 0 : index
    %c0_19 = arith.constant 0 : index
    %30 = vector.load %arg9[%c0_18, %c0_19] : memref<32x1xf32, #tpu.memory_space<vmem>>, vector<32x1xf32>
    %31 = vector.broadcast %30 : vector<32x1xf32> to vector<32x768xf32>
    %32 = arith.addf %29, %31 : vector<32x768xf32>
    %cst_20 = arith.constant 0.000000e+00 : f32
    %33 = vector.broadcast %cst_20 : f32 to vector<32x768xf32>
    %34 = arith.maximumf %32, %33 : vector<32x768xf32>
    %35 = vector.extract_strided_slice %16 {offsets = [0, 128], sizes = [1, 768], strides = [1, 1]} : vector<1x1024xf32> to vector<1x768xf32>
    %36 = vector.broadcast %35 : vector<1x768xf32> to vector<32x768xf32>
    %37 = arith.mulf %34, %36 : vector<32x768xf32>
    %38 = arith.truncf %37 : vector<32x768xf32> to vector<32x768xbf16>
    %39 = vector.extract_strided_slice %38 {offsets = [0, 109], sizes = [32, 512], strides = [1, 1]} : vector<32x768xbf16> to vector<32x512xbf16>
    %40 = vector.extract_strided_slice %38 {offsets = [0, 110], sizes = [32, 512], strides = [1, 1]} : vector<32x768xbf16> to vector<32x512xbf16>
    %41 = vector.extract_strided_slice %38 {offsets = [0, 111], sizes = [32, 512], strides = [1, 1]} : vector<32x768xbf16> to vector<32x512xbf16>
    %42 = vector.extract_strided_slice %38 {offsets = [0, 127], sizes = [32, 512], strides = [1, 1]} : vector<32x768xbf16> to vector<32x512xbf16>
    %43 = vector.extract_strided_slice %38 {offsets = [0, 128], sizes = [32, 512], strides = [1, 1]} : vector<32x768xbf16> to vector<32x512xbf16>
    %44 = vector.extract_strided_slice %38 {offsets = [0, 129], sizes = [32, 512], strides = [1, 1]} : vector<32x768xbf16> to vector<32x512xbf16>
    %45 = vector.extract_strided_slice %38 {offsets = [0, 145], sizes = [32, 512], strides = [1, 1]} : vector<32x768xbf16> to vector<32x512xbf16>
    %46 = vector.extract_strided_slice %38 {offsets = [0, 146], sizes = [32, 512], strides = [1, 1]} : vector<32x768xbf16> to vector<32x512xbf16>
    %47 = vector.extract_strided_slice %38 {offsets = [0, 147], sizes = [32, 512], strides = [1, 1]} : vector<32x768xbf16> to vector<32x512xbf16>
    %48 = tpu.concatenate %39, %40, %41, %42, %43, %44, %45, %46, %47 in 0 : vector<32x512xbf16>, vector<32x512xbf16>, vector<32x512xbf16>, vector<32x512xbf16>, vector<32x512xbf16>, vector<32x512xbf16>, vector<32x512xbf16>, vector<32x512xbf16>, vector<32x512xbf16> -> vector<288x512xbf16>
    %c0_21 = arith.constant 0 : index
    %c0_22 = arith.constant 0 : index
    %49 = vector.load %arg10[%c0_21, %c0_22] : memref<32x288xbf16, #tpu.memory_space<vmem>>, vector<32x288xbf16>
    %cst_23 = arith.constant dense<0.000000e+00> : vector<32x512xf32>
    %50 = tpu.matmul %49, %48, %cst_23 {dimension_numbers = #tpu.dot_dimension_numbers<[1], [0], [0], [1], [0, 0, 1, 1], [], []>} : vector<32x288xbf16>, vector<288x512xbf16>, vector<32x512xf32> -> vector<32x512xf32>
    %c0_24 = arith.constant 0 : index
    %c0_25 = arith.constant 0 : index
    %51 = vector.load %arg11[%c0_24, %c0_25] : memref<32x1xf32, #tpu.memory_space<vmem>>, vector<32x1xf32>
    %52 = vector.broadcast %51 : vector<32x1xf32> to vector<32x512xf32>
    %53 = arith.addf %50, %52 : vector<32x512xf32>
    %cst_26 = arith.constant 0.000000e+00 : f32
    %54 = vector.broadcast %cst_26 : f32 to vector<32x512xf32>
    %55 = arith.maximumf %53, %54 : vector<32x512xf32>
    %cst_27 = arith.constant 9.99999997E-7 : f32
    %56 = vector.broadcast %cst_27 : f32 to vector<32x512xf32>
    %57 = arith.maximumf %55, %56 : vector<32x512xf32>
    %58 = arith.mulf %57, %57 : vector<32x512xf32>
    %59 = arith.mulf %58, %57 : vector<32x512xf32>
    %60 = vector.extract_strided_slice %16 {offsets = [0, 256], sizes = [1, 512], strides = [1, 1]} : vector<1x1024xf32> to vector<1x512xf32>
    %61 = vector.broadcast %60 : vector<1x512xf32> to vector<32x512xf32>
    %62 = arith.mulf %59, %61 : vector<32x512xf32>
    %cst_28 = arith.constant dense<0.000000e+00> : vector<32xf32>
    %63 = vector.multi_reduction <add>, %62, %cst_28 [1] : vector<32x512xf32> to vector<32xf32>
    %64 = vector.shape_cast %63 : vector<32xf32> to vector<32x1xf32>
    %65 = tpu.iota {dimensions = array<i32: 1>} : vector<1x2xi32>
    %66 = vector.broadcast %arg0 : i32 to vector<1x2xi32>
    %67 = arith.cmpi eq, %65, %66 : vector<1x2xi32>
    %c0_29 = arith.constant 0 : index
    %c0_30 = arith.constant 0 : index
    %68 = vector.load %arg15[%c0_29, %c0_30] : memref<32x2xf32, #tpu.memory_space<vmem>>, vector<32x2xf32>
    %69 = arith.extui %67 : vector<1x2xi1> to vector<1x2xi32>
    %70 = arith.sitofp %69 : vector<1x2xi32> to vector<1x2xf32>
    %71 = vector.broadcast %64 : vector<32x1xf32> to vector<32x2xf32>
    %72 = vector.broadcast %70 : vector<1x2xf32> to vector<32x2xf32>
    %73 = arith.mulf %71, %72 : vector<32x2xf32>
    %74 = arith.addf %68, %73 : vector<32x2xf32>
    %c0_31 = arith.constant 0 : index
    %c0_32 = arith.constant 0 : index
    %75 = vector.load %arg15[%c0_31, %c0_32] : memref<32x2xf32, #tpu.memory_space<vmem>>, vector<32x2xf32>
    tpu.vector_store %arg15[%c0_31, %c0_32], %74 {strides = array<i32>} : memref<32x2xf32, #tpu.memory_space<vmem>>, vector<32x2xf32>,
    %c1_i32 = arith.constant 1 : i32
    %76 = arith.cmpi eq, %arg0, %c1_i32 : i32
    %c0_i32_33 = arith.constant 0 : i32
    %77 = arith.cmpi eq, %arg1, %c0_i32_33 : i32
    %78 = arith.andi %76, %77 : i1
    %79 = arith.extui %78 : i1 to i32
    %c0_i32_34 = arith.constant 0 : i32
    %80 = arith.cmpi ne, %79, %c0_i32_34 : i32
    scf.if %80 {
      %c0_35 = arith.constant 0 : index
      %c0_36 = arith.constant 0 : index
      %81 = vector.load %arg15[%c0_35, %c0_36] : memref<32x2xf32, #tpu.memory_space<vmem>>, vector<32x2xf32>
      %cst_37 = arith.constant 3.906250e-03 : f32
      %82 = vector.broadcast %cst_37 : f32 to vector<32x2xf32>
      %83 = arith.mulf %81, %82 : vector<32x2xf32>
      %84 = math.log %83 : vector<32x2xf32>
      %cst_38 = arith.constant 0.333333343 : f32
      %85 = vector.broadcast %cst_38 : f32 to vector<32x2xf32>
      %86 = arith.mulf %84, %85 : vector<32x2xf32>
      %87 = math.exp %86 : vector<32x2xf32>
      %88 = arith.mulf %87, %87 : vector<32x2xf32>
      %cst_39 = arith.constant dense<0.000000e+00> : vector<2xf32>
      %89 = vector.multi_reduction <add>, %88, %cst_39 [0] : vector<32x2xf32> to vector<2xf32>
      %90 = vector.shape_cast %89 : vector<2xf32> to vector<1x2xf32>
      %91 = math.sqrt %90 : vector<1x2xf32>
      %cst_40 = arith.constant 9.99999997E-7 : f32
      %92 = vector.broadcast %cst_40 : f32 to vector<1x2xf32>
      %93 = arith.addf %91, %92 : vector<1x2xf32>
      %94 = vector.broadcast %93 : vector<1x2xf32> to vector<32x2xf32>
      %95 = arith.divf %87, %94 : vector<32x2xf32>
      %c0_41 = arith.constant 0 : index
      %c0_42 = arith.constant 0 : index
      %96 = vector.load %arg12[%c0_41, %c0_42] : memref<32x32xf32, #tpu.memory_space<vmem>>, vector<32x32xf32>
      %cst_43 = arith.constant dense<0.000000e+00> : vector<32x2xf32>
      %97 = tpu.matmul %96, %95, %cst_43 {dimension_numbers = #tpu.dot_dimension_numbers<[1], [0], [0], [1], [0, 0, 1, 1], [], []>} : vector<32x32xf32>, vector<32x2xf32>, vector<32x2xf32> -> vector<32x2xf32>
      %c0_44 = arith.constant 0 : index
      %c0_45 = arith.constant 0 : index
      %98 = vector.load %arg13[%c0_44, %c0_45] : memref<32x1xf32, #tpu.memory_space<vmem>>, vector<32x1xf32>
      %99 = vector.broadcast %98 : vector<32x1xf32> to vector<32x2xf32>
      %100 = arith.addf %97, %99 : vector<32x2xf32>
      %101 = arith.mulf %100, %100 : vector<32x2xf32>
      %cst_46 = arith.constant dense<0.000000e+00> : vector<2xf32>
      %102 = vector.multi_reduction <add>, %101, %cst_46 [0] : vector<32x2xf32> to vector<2xf32>
      %103 = vector.shape_cast %102 : vector<2xf32> to vector<1x2xf32>
      %104 = math.sqrt %103 : vector<1x2xf32>
      %cst_47 = arith.constant 9.99999997E-7 : f32
      %105 = vector.broadcast %cst_47 : f32 to vector<1x2xf32>
      %106 = arith.addf %104, %105 : vector<1x2xf32>
      %107 = vector.broadcast %106 : vector<1x2xf32> to vector<32x2xf32>
      %108 = arith.divf %100, %107 : vector<32x2xf32>
      %c0_48 = arith.constant 0 : index
      %c0_49 = arith.constant 0 : index
      %109 = vector.load %arg14[%c0_48, %c0_49] : memref<32x2xf32, #tpu.memory_space<vmem>>, vector<32x2xf32>
      tpu.vector_store %arg14[%c0_48, %c0_49], %108 {strides = array<i32>} : memref<32x2xf32, #tpu.memory_space<vmem>>, vector<32x2xf32>,
    } else {
    }
    return
  }
  func.func @transform_0(%arg0: i32, %arg1: i32) -> (i32, i32, i32) {
    %c1_i32 = arith.constant 1 : i32
    %0 = arith.addi %arg1, %c1_i32 : i32
    %c0_i32 = arith.constant 0 : i32
    %c0_i32_0 = arith.constant 0 : i32
    return %arg0, %c0_i32, %0 : i32, i32, i32
  }
  func.func @transform_1(%arg0: i32, %arg1: i32) -> (i32, i32, i32) {
    %c1_i32 = arith.constant 1 : i32
    %0 = arith.addi %arg1, %c1_i32 : i32
    %c2_i32 = arith.constant 2 : i32
    %1 = arith.muli %0, %c2_i32 : i32
    %c1_i32_0 = arith.constant 1 : i32
    %2 = arith.subi %1, %c1_i32_0 : i32
    %c0_i32 = arith.constant 0 : i32
    %c0_i32_1 = arith.constant 0 : i32
    return %arg0, %c0_i32, %2 : i32, i32, i32
  }
  func.func @transform_2(%arg0: i32, %arg1: i32) -> (i32, i32, i32) {
    %c2_i32 = arith.constant 2 : i32
    %0 = arith.addi %arg1, %c2_i32 : i32
    %c2_i32_0 = arith.constant 2 : i32
    %1 = arith.muli %0, %c2_i32_0 : i32
    %c0_i32 = arith.constant 0 : i32
    %c0_i32_1 = arith.constant 0 : i32
    return %arg0, %c0_i32, %1 : i32, i32, i32
  }
  func.func @transform_3(%arg0: i32, %arg1: i32) -> (i32, i32) {
    %c1_i32 = arith.constant 1 : i32
    %0 = arith.addi %arg1, %c1_i32 : i32
    %c0_i32 = arith.constant 0 : i32
    %c0_i32_0 = arith.constant 0 : i32
    return %c0_i32, %0 : i32, i32
  }
  func.func @transform_4(%arg0: i32, %arg1: i32) -> (i32, i32) {
    %c1_i32 = arith.constant 1 : i32
    %0 = arith.addi %arg1, %c1_i32 : i32
    %c2_i32 = arith.constant 2 : i32
    %1 = arith.muli %0, %c2_i32 : i32
    %c1_i32_0 = arith.constant 1 : i32
    %2 = arith.subi %1, %c1_i32_0 : i32
    %c0_i32 = arith.constant 0 : i32
    %c0_i32_1 = arith.constant 0 : i32
    return %c0_i32, %2 : i32, i32
  }
  func.func @transform_5(%arg0: i32, %arg1: i32) -> (i32, i32) {
    %c2_i32 = arith.constant 2 : i32
    %0 = arith.addi %arg1, %c2_i32 : i32
    %c2_i32_0 = arith.constant 2 : i32
    %1 = arith.muli %0, %c2_i32_0 : i32
    %c0_i32 = arith.constant 0 : i32
    %c0_i32_1 = arith.constant 0 : i32
    return %c0_i32, %1 : i32, i32
  }
  func.func @transform_6(%arg0: i32, %arg1: i32) -> (i32, i32) {
    %c0_i32 = arith.constant 0 : i32
    %c0_i32_0 = arith.constant 0 : i32
    %c0_i32_1 = arith.constant 0 : i32
    return %c0_i32, %c0_i32_0 : i32, i32
  }
  func.func @transform_7(%arg0: i32, %arg1: i32) -> (i32, i32) {
    %c0_i32 = arith.constant 0 : i32
    %c0_i32_0 = arith.constant 0 : i32
    %c0_i32_1 = arith.constant 0 : i32
    return %c0_i32, %c0_i32_0 : i32, i32
  }
  func.func @transform_8(%arg0: i32, %arg1: i32) -> (i32, i32) {
    %c0_i32 = arith.constant 0 : i32
    %c0_i32_0 = arith.constant 0 : i32
    %c0_i32_1 = arith.constant 0 : i32
    return %c0_i32, %c0_i32_0 : i32, i32
  }
  func.func @transform_9(%arg0: i32, %arg1: i32) -> (i32, i32) {
    %c0_i32 = arith.constant 0 : i32
    %c0_i32_0 = arith.constant 0 : i32
    %c0_i32_1 = arith.constant 0 : i32
    return %c0_i32, %c0_i32_0 : i32, i32
  }
  func.func @transform_10(%arg0: i32, %arg1: i32) -> (i32, i32) {
    %c0_i32 = arith.constant 0 : i32
    %c0_i32_0 = arith.constant 0 : i32
    %c0_i32_1 = arith.constant 0 : i32
    return %c0_i32, %c0_i32_0 : i32, i32
  }
  func.func @transform_11(%arg0: i32, %arg1: i32) -> (i32, i32) {
    %c0_i32 = arith.constant 0 : i32
    %c0_i32_0 = arith.constant 0 : i32
    %c0_i32_1 = arith.constant 0 : i32
    return %c0_i32, %c0_i32_0 : i32, i32
  }
  func.func @transform_12(%arg0: i32, %arg1: i32) -> (i32, i32) {
    %c0_i32 = arith.constant 0 : i32
    %c0_i32_0 = arith.constant 0 : i32
    %c0_i32_1 = arith.constant 0 : i32
    return %c0_i32, %c0_i32_0 : i32, i32
  }
}

</mosaic_0001>

<llo_original>
// kernel: _lambda_.1
$region0: #{_lambda_.1}
  #allocation0 [shape = 'u32[]', space=smem, size = 0x4, offset = 0x4, fixed_abs, tag = 'smem constant byte address 0x4 - core index']
  #allocation1 [shape = 'u32[144,128]{1,0:T(1,128)}', space=vmem, size = 0x12000, scoped, tag = 'internal scratch']
  #allocation2 [shape = 'f32[32,2]{1,0:T(8,128)}', space=vmem, size = 0x4000, scoped, tag = 'scratch operand']
  %s0 = inlined_call_operand.vmem [shape: bf16[2,8,1536], index: 0, kind: input, shape index: {}, may-alias: {0,1,2}]
  %s1 = inlined_call_operand.vmem [shape: bf16[2,8,1536], index: 1, kind: input, shape index: {}, may-alias: {0,1,2}]
  %s2 = inlined_call_operand.vmem [shape: bf16[2,8,1536], index: 2, kind: input, shape index: {}, may-alias: {0,1,2}]
  %s3 = inlined_call_operand.vmem [shape: f32[1,1536], index: 3, kind: input, shape index: {}, may-alias: {3,4,5}]
  %s4 = inlined_call_operand.vmem [shape: f32[1,1536], index: 4, kind: input, shape index: {}, may-alias: {3,4,5}]
  %s5 = inlined_call_operand.vmem [shape: f32[1,1536], index: 5, kind: input, shape index: {}, may-alias: {3,4,5}]
  %s6 = inlined_call_operand.vmem [shape: bf16[32,72], index: 6, kind: input, shape index: {}]
  %s7 = inlined_call_operand.vmem [shape: f32[32,1], index: 7, kind: input, shape index: {}]
  %s8 = inlined_call_operand.vmem [shape: bf16[32,288], index: 8, kind: input, shape index: {}]
  %s9 = inlined_call_operand.vmem [shape: f32[32,1], index: 9, kind: input, shape index: {}]
  %s10 = inlined_call_operand.vmem [shape: f32[32,32], index: 10, kind: input, shape index: {}]
  %s11 = inlined_call_operand.vmem [shape: f32[32,1], index: 11, kind: input, shape index: {}]
  %s12 = inlined_call_operand.vmem [shape: f32[32,2], index: 12, kind: output, shape index: {}]
  %s13 = sld [smem:[#allocation0]]
  $region89: #{_lambda_.1} parent=0
    _
  %s15 = ssub.s32 1, %s13
  %s16 = scalar_select 0, %s15, %s13
  loop: start=0, step=1, limit=4
  $region2: #{_lambda_.1} parent=0 // loop_pre_header
    _
  $region3: #{_lambda_.1} parent=0 // loop_header
    %s18 = sphi 0, %s22
    %p19 = scmp.ge.s32.totalorder %s18, 4
    %s25 = sphi 0, %s37
    %s26 = sphi 0, %s33
    %s27 = sphi 0, %s25
    %s28 = sphi 0, %s26
    %s29 = sphi 0, %s27
    %s30 = sphi 0, %s28
    %s44 = sphi 0, %s46
    %s47 = sphi 0, %s44
    %s48 = sphi 0, %s47
    %s64 = sphi 0, %s48
    %s78 = sphi 0, %s80
    %s81 = sphi 0, %s78
    %s82 = sphi 0, %s81
    %s98 = sphi 0, %s82
    %s110 = sphi 0, %s112
    %s113 = sphi 0, %s110
    %s114 = sphi 0, %s113
    %s130 = sphi 0, %s114
    %s138 = sphi 0, %s140
    %s141 = sphi 0, %s138
    %s142 = sphi 0, %s141
    %s158 = sphi 0, %s142
    %s170 = sphi 0, %s172
    %s173 = sphi 0, %s170
    %s174 = sphi 0, %s173
    %s190 = sphi 0, %s174
    %s200 = sphi 0, %s202
    %s203 = sphi 0, %s200
    %s204 = sphi 0, %s203
    %s220 = sphi 0, %s204
    %s224 = sphi 0, %s224
    %s226 = sphi 0, %s224
    %s227 = sphi 0, %s226
    %s241 = sphi 0, %s227
    %s245 = sphi 0, %s245
    %s247 = sphi 0, %s245
    %s248 = sphi 0, %s247
    %s262 = sphi 0, %s248
    %s266 = sphi 0, %s266
    %s268 = sphi 0, %s266
    %s269 = sphi 0, %s268
    %s283 = sphi 0, %s269
    %s287 = sphi 0, %s287
    %s289 = sphi 0, %s287
    %s290 = sphi 0, %s289
    %s304 = sphi 0, %s290
    %s308 = sphi 0, %s308
    %s310 = sphi 0, %s308
    %s311 = sphi 0, %s310
    %s325 = sphi 0, %s311
    %s329 = sphi 0, %s329
    %s331 = sphi 0, %s329
    %s332 = sphi 0, %s331
    %s346 = sphi 0, %s332
    %s350 = sphi 0, %s350
    %s352 = sphi 0, %s350
    %s353 = sphi 0, %s352
    %s367 = sphi 0, %s353
  $region4: #{_lambda_.1} parent=0 // loop_header_branch
    %21 = sbr.rel (%p19) target = $region8
  $region5: #{_lambda_.1} parent=0 // loop_body
    %s23 = ssub.s32 %s18, 1
    %s24 = ssub.s32 %s18, 2
    %s31 = sadd.s32 1, %s26
    %p32 = scmp.ge.s32.totalorder %s31, 1
    %s33 = scalar_select %p32, 0, %s31
    %s34 = sadd.s32 1, %s25
    %s35 = scalar_select %p32, %s34, %s25
    %p36 = scmp.ge.s32.totalorder %s35, 2
    %s37 = scalar_select %p36, 0, %s35
    %s38 = sadd.s32 %s26, 1
    %s39 = sadd.s32 %s33, 1
    %s40 = ssub.s32 %s25, %s37
    %s41 = ssub.s32 %s38, %s39
    %s42 = sor.u32 %s40, %s41
    %p43 = scmp.eq.s32.totalorder %s42, 0
    %s45 = sadd.s32 %s44, 1
    %s46 = scalar_select %p43, %s44, %s45
    %p49 = pneg %p43
    %p50 = scmp.eq.s32.totalorder %s18, 1
    %p51 = por %p49, %p50
    %p52 = scmp.ne.s32.totalorder %s44, %s47
    %p53 = scmp.eq.s32.totalorder %s18, 0
    %p54 = por %p52, %p53
    %p55 = scmp.ne.s32.totalorder %s44, %s47
    %p56 = scmp.eq.s32.totalorder %s23, 1
    %p57 = por %p55, %p56
    %p58 = scmp.ne.s32.totalorder %s47, %s48
    %p59 = scmp.eq.s32.totalorder %s23, 0
    %p60 = por %p58, %p59
    %p61 = scmp.ne.s32.totalorder %s47, %s48
    %p62 = scmp.eq.s32.totalorder %s24, 1
    %p63 = por %p61, %p62
    %p65 = scmp.ne.s32.totalorder %s48, %s64
    %p66 = scmp.eq.s32.totalorder %s24, 0
    %p67 = por %p65, %p66
    %s68 = sadd.s32 %s26, 1
    %s69 = smul.u32 %s68, 2
    %s70 = ssub.s32 %s69, 1
    %s71 = sadd.s32 %s33, 1
    %s72 = smul.u32 %s71, 2
    %s73 = ssub.s32 %s72, 1
    %s74 = ssub.s32 %s25, %s37
    %s75 = ssub.s32 %s70, %s73
    %s76 = sor.u32 %s74, %s75
    %p77 = scmp.eq.s32.totalorder %s76, 0
    %s79 = sadd.s32 %s78, 1
    %s80 = scalar_select %p77, %s78, %s79
    %p83 = pneg %p77
    %p84 = scmp.eq.s32.totalorder %s18, 1
    %p85 = por %p83, %p84
    %p86 = scmp.ne.s32.totalorder %s78, %s81
    %p87 = scmp.eq.s32.totalorder %s18, 0
    %p88 = por %p86, %p87
    %p89 = scmp.ne.s32.totalorder %s78, %s81
    %p90 = scmp.eq.s32.totalorder %s23, 1
    %p91 = por %p89, %p90
    %p92 = scmp.ne.s32.totalorder %s81, %s82
    %p93 = scmp.eq.s32.totalorder %s23, 0
    %p94 = por %p92, %p93
    %p95 = scmp.ne.s32.totalorder %s81, %s82
    %p96 = scmp.eq.s32.totalorder %s24, 1
    %p97 = por %p95, %p96
    %p99 = scmp.ne.s32.totalorder %s82, %s98
    %p100 = scmp.eq.s32.totalorder %s24, 0
    %p101 = por %p99, %p100
    %s102 = sadd.s32 %s26, 2
    %s103 = smul.u32 %s102, 2
    %s104 = sadd.s32 %s33, 2
    %s105 = smul.u32 %s104, 2
    %s106 = ssub.s32 %s25, %s37
    %s107 = ssub.s32 %s103, %s105
    %s108 = sor.u32 %s106, %s107
    %p109 = scmp.eq.s32.totalorder %s108, 0
    %s111 = sadd.s32 %s110, 1
    %s112 = scalar_select %p109, %s110, %s111
    %p115 = pneg %p109
    %p116 = scmp.eq.s32.totalorder %s18, 1
    %p117 = por %p115, %p116
    %p118 = scmp.ne.s32.totalorder %s110, %s113
    %p119 = scmp.eq.s32.totalorder %s18, 0
    %p120 = por %p118, %p119
    %p121 = scmp.ne.s32.totalorder %s110, %s113
    %p122 = scmp.eq.s32.totalorder %s23, 1
    %p123 = por %p121, %p122
    %p124 = scmp.ne.s32.totalorder %s113, %s114
    %p125 = scmp.eq.s32.totalorder %s23, 0
    %p126 = por %p124, %p125
    %p127 = scmp.ne.s32.totalorder %s113, %s114
    %p128 = scmp.eq.s32.totalorder %s24, 1
    %p129 = por %p127, %p128
    %p131 = scmp.ne.s32.totalorder %s114, %s130
    %p132 = scmp.eq.s32.totalorder %s24, 0
    %p133 = por %p131, %p132
    %s134 = sadd.s32 %s26, 1
    %s135 = sadd.s32 %s33, 1
    %s136 = ssub.s32 %s134, %s135
    %p137 = scmp.eq.s32.totalorder %s136, 0
    %s139 = sadd.s32 %s138, 1
    %s140 = scalar_select %p137, %s138, %s139
    %p143 = pneg %p137
    %p144 = scmp.eq.s32.totalorder %s18, 1
    %p145 = por %p143, %p144
    %p146 = scmp.ne.s32.totalorder %s138, %s141
    %p147 = scmp.eq.s32.totalorder %s18, 0
    %p148 = por %p146, %p147
    %p149 = scmp.ne.s32.totalorder %s138, %s141
    %p150 = scmp.eq.s32.totalorder %s23, 1
    %p151 = por %p149, %p150
    %p152 = scmp.ne.s32.totalorder %s141, %s142
    %p153 = scmp.eq.s32.totalorder %s23, 0
    %p154 = por %p152, %p153
    %p155 = scmp.ne.s32.totalorder %s141, %s142
    %p156 = scmp.eq.s32.totalorder %s24, 1
    %p157 = por %p155, %p156
    %p159 = scmp.ne.s32.totalorder %s142, %s158
    %p160 = scmp.eq.s32.totalorder %s24, 0
    %p161 = por %p159, %p160
    %s162 = sadd.s32 %s26, 1
    %s163 = smul.u32 %s162, 2
    %s164 = ssub.s32 %s163, 1
    %s165 = sadd.s32 %s33, 1
    %s166 = smul.u32 %s165, 2
    %s167 = ssub.s32 %s166, 1
    %s168 = ssub.s32 %s164, %s167
    %p169 = scmp.eq.s32.totalorder %s168, 0
    %s171 = sadd.s32 %s170, 1
    %s172 = scalar_select %p169, %s170, %s171
    %p175 = pneg %p169
    %p176 = scmp.eq.s32.totalorder %s18, 1
    %p177 = por %p175, %p176
    %p178 = scmp.ne.s32.totalorder %s170, %s173
    %p179 = scmp.eq.s32.totalorder %s18, 0
    %p180 = por %p178, %p179
    %p181 = scmp.ne.s32.totalorder %s170, %s173
    %p182 = scmp.eq.s32.totalorder %s23, 1
    %p183 = por %p181, %p182
    %p184 = scmp.ne.s32.totalorder %s173, %s174
    %p185 = scmp.eq.s32.totalorder %s23, 0
    %p186 = por %p184, %p185
    %p187 = scmp.ne.s32.totalorder %s173, %s174
    %p188 = scmp.eq.s32.totalorder %s24, 1
    %p189 = por %p187, %p188
    %p191 = scmp.ne.s32.totalorder %s174, %s190
    %p192 = scmp.eq.s32.totalorder %s24, 0
    %p193 = por %p191, %p192
    %s194 = sadd.s32 %s26, 2
    %s195 = smul.u32 %s194, 2
    %s196 = sadd.s32 %s33, 2
    %s197 = smul.u32 %s196, 2
    %s198 = ssub.s32 %s195, %s197
    %p199 = scmp.eq.s32.totalorder %s198, 0
    %s201 = sadd.s32 %s200, 1
    %s202 = scalar_select %p199, %s200, %s201
    %p205 = pneg %p199
    %p206 = scmp.eq.s32.totalorder %s18, 1
    %p207 = por %p205, %p206
    %p208 = scmp.ne.s32.totalorder %s200, %s203
    %p209 = scmp.eq.s32.totalorder %s18, 0
    %p210 = por %p208, %p209
    %p211 = scmp.ne.s32.totalorder %s200, %s203
    %p212 = scmp.eq.s32.totalorder %s23, 1
    %p213 = por %p211, %p212
    %p214 = scmp.ne.s32.totalorder %s203, %s204
    %p215 = scmp.eq.s32.totalorder %s23, 0
    %p216 = por %p214, %p215
    %p217 = scmp.ne.s32.totalorder %s203, %s204
    %p218 = scmp.eq.s32.totalorder %s24, 1
    %p219 = por %p217, %p218
    %p221 = scmp.ne.s32.totalorder %s204, %s220
    %p222 = scmp.eq.s32.totalorder %s24, 0
    %p223 = por %p221, %p222
    %s225 = sadd.s32 %s224, 1
    %p228 = scmp.eq.s32.totalorder %s18, 1
    %p229 = scmp.ne.s32.totalorder %s224, %s226
    %p230 = scmp.eq.s32.totalorder %s18, 0
    %p231 = por %p229, %p230
    %p232 = scmp.ne.s32.totalorder %s224, %s226
    %p233 = scmp.eq.s32.totalorder %s23, 1
    %p234 = por %p232, %p233
    %p235 = scmp.ne.s32.totalorder %s226, %s227
    %p236 = scmp.eq.s32.totalorder %s23, 0
    %p237 = por %p235, %p236
    %p238 = scmp.ne.s32.totalorder %s226, %s227
    %p239 = scmp.eq.s32.totalorder %s24, 1
    %p240 = por %p238, %p239
    %p242 = scmp.ne.s32.totalorder %s227, %s241
    %p243 = scmp.eq.s32.totalorder %s24, 0
    %p244 = por %p242, %p243
    %s246 = sadd.s32 %s245, 1
    %p249 = scmp.eq.s32.totalorder %s18, 1
    %p250 = scmp.ne.s32.totalorder %s245, %s247
    %p251 = scmp.eq.s32.totalorder %s18, 0
    %p252 = por %p250, %p251
    %p253 = scmp.ne.s32.totalorder %s245, %s247
    %p254 = scmp.eq.s32.totalorder %s23, 1
    %p255 = por %p253, %p254
    %p256 = scmp.ne.s32.totalorder %s247, %s248
    %p257 = scmp.eq.s32.totalorder %s23, 0
    %p258 = por %p256, %p257
    %p259 = scmp.ne.s32.totalorder %s247, %s248
    %p260 = scmp.eq.s32.totalorder %s24, 1
    %p261 = por %p259, %p260
    %p263 = scmp.ne.s32.totalorder %s248, %s262
    %p264 = scmp.eq.s32.totalorder %s24, 0
    %p265 = por %p263, %p264
    %s267 = sadd.s32 %s266, 1
    %p270 = scmp.eq.s32.totalorder %s18, 1
    %p271 = scmp.ne.s32.totalorder %s266, %s268
    %p272 = scmp.eq.s32.totalorder %s18, 0
    %p273 = por %p271, %p272
    %p274 = scmp.ne.s32.totalorder %s266, %s268
    %p275 = scmp.eq.s32.totalorder %s23, 1
    %p276 = por %p274, %p275
    %p277 = scmp.ne.s32.totalorder %s268, %s269
    %p278 = scmp.eq.s32.totalorder %s23, 0
    %p279 = por %p277, %p278
    %p280 = scmp.ne.s32.totalorder %s268, %s269
    %p281 = scmp.eq.s32.totalorder %s24, 1
    %p282 = por %p280, %p281
    %p284 = scmp.ne.s32.totalorder %s269, %s283
    %p285 = scmp.eq.s32.totalorder %s24, 0
    %p286 = por %p284, %p285
    %s288 = sadd.s32 %s287, 1
    %p291 = scmp.eq.s32.totalorder %s18, 1
    %p292 = scmp.ne.s32.totalorder %s287, %s289
    %p293 = scmp.eq.s32.totalorder %s18, 0
    %p294 = por %p292, %p293
    %p295 = scmp.ne.s32.totalorder %s287, %s289
    %p296 = scmp.eq.s32.totalorder %s23, 1
    %p297 = por %p295, %p296
    %p298 = scmp.ne.s32.totalorder %s289, %s290
    %p299 = scmp.eq.s32.totalorder %s23, 0
    %p300 = por %p298, %p299
    %p301 = scmp.ne.s32.totalorder %s289, %s290
    %p302 = scmp.eq.s32.totalorder %s24, 1
    %p303 = por %p301, %p302
    %p305 = scmp.ne.s32.totalorder %s290, %s304
    %p306 = scmp.eq.s32.totalorder %s24, 0
    %p307 = por %p305, %p306
    %s309 = sadd.s32 %s308, 1
    %p312 = scmp.eq.s32.totalorder %s18, 1
    %p313 = scmp.ne.s32.totalorder %s308, %s310
    %p314 = scmp.eq.s32.totalorder %s18, 0
    %p315 = por %p313, %p314
    %p316 = scmp.ne.s32.totalorder %s308, %s310
    %p317 = scmp.eq.s32.totalorder %s23, 1
    %p318 = por %p316, %p317
    %p319 = scmp.ne.s32.totalorder %s310, %s311
    %p320 = scmp.eq.s32.totalorder %s23, 0
    %p321 = por %p319, %p320
    %p322 = scmp.ne.s32.totalorder %s310, %s311
    %p323 = scmp.eq.s32.totalorder %s24, 1
    %p324 = por %p322, %p323
    %p326 = scmp.ne.s32.totalorder %s311, %s325
    %p327 = scmp.eq.s32.totalorder %s24, 0
    %p328 = por %p326, %p327
    %s330 = sadd.s32 %s329, 1
    %p333 = scmp.eq.s32.totalorder %s18, 1
    %p334 = scmp.ne.s32.totalorder %s329, %s331
    %p335 = scmp.eq.s32.totalorder %s18, 0
    %p336 = por %p334, %p335
    %p337 = scmp.ne.s32.totalorder %s329, %s331
    %p338 = scmp.eq.s32.totalorder %s23, 1
    %p339 = por %p337, %p338
    %p340 = scmp.ne.s32.totalorder %s331, %s332
    %p341 = scmp.eq.s32.totalorder %s23, 0
    %p342 = por %p340, %p341
    %p343 = scmp.ne.s32.totalorder %s331, %s332
    %p344 = scmp.eq.s32.totalorder %s24, 1
    %p345 = por %p343, %p344
    %p347 = scmp.ne.s32.totalorder %s332, %s346
    %p348 = scmp.eq.s32.totalorder %s24, 0
    %p349 = por %p347, %p348
    %s351 = sadd.s32 %s350, 1
    %p354 = scmp.eq.s32.totalorder %s18, 1
    %p355 = scmp.ne.s32.totalorder %s350, %s352
    %p356 = scmp.eq.s32.totalorder %s18, 0
    %p357 = por %p355, %p356
    %p358 = scmp.ne.s32.totalorder %s350, %s352
    %p359 = scmp.eq.s32.totalorder %s23, 1
    %p360 = por %p358, %p359
    %p361 = scmp.ne.s32.totalorder %s352, %s353
    %p362 = scmp.eq.s32.totalorder %s23, 0
    %p363 = por %p361, %p362
    %p364 = scmp.ne.s32.totalorder %s352, %s353
    %p365 = scmp.eq.s32.totalorder %s24, 1
    %p366 = por %p364, %p365
    %p368 = scmp.ne.s32.totalorder %s353, %s367
    %p369 = scmp.eq.s32.totalorder %s24, 0
    %p370 = por %p368, %p369
    %p371 = scmp.le.s32.totalorder 1, %s18
    %p372 = scmp.lt.s32.totalorder %s18, 3
    %p373 = pnand %p371, %p372
    %p374 = pneg %p373
    // Predicated region
    $region9: #{_lambda_.1} parent=5 // pred_check
      _
    $region10: #{_lambda_.1} parent=5 // pred_check_branch
      %376 = sbr.rel (%p373) target = $region12
    $region11: #{_lambda_.1} parent=5 // pred_region
      %s377 = ssub.s32 %s18, 1
      // Predicated region
      $region13: #{_lambda_.1} parent=11 // pred_check
        %p378 = pneg %p154
      $region14: #{_lambda_.1} parent=11 // pred_check_branch
        %380 = sbr.rel (%p378) target = $region16
      $region15: #{_lambda_.1} parent=11 // pred_region
        %s381 = sadd.s32 %s28, 1
        %s382 = smul.u32 4, %s381
        %p383 = scmp.lt.s32.totalorder %s382, 11
        %s384 = scalar_select %p383, %s382, 11
        %s385 = scalar_lea.vmem %s3, %s384
        %s386 = sadd.s32 %s28, 1
        %s387 = smul.u32 4, %s386
      $region16: #{_lambda_.1} parent=11 // pred_fallthru
        _
      // Predicated region
      $region17: #{_lambda_.1} parent=11 // pred_check
        %p388 = pneg %p186
      $region18: #{_lambda_.1} parent=11 // pred_check_branch
        %390 = sbr.rel (%p388) target = $region20
      $region19: #{_lambda_.1} parent=11 // pred_region
        %s391 = sadd.s32 %s28, 1
        %s392 = smul.u32 %s391, 2
        %s393 = ssub.s32 %s392, 1
        %s394 = smul.u32 2, %s393
        %p395 = scmp.lt.s32.totalorder %s394, 11
        %s396 = scalar_select %p395, %s394, 11
        %s397 = scalar_lea.vmem %s4, %s396
        %s398 = sadd.s32 %s28, 1
        %s399 = smul.u32 %s398, 2
        %s400 = ssub.s32 %s399, 1
        %s401 = smul.u32 2, %s400
      $region20: #{_lambda_.1} parent=11 // pred_fallthru
        _
      // Predicated region
      $region21: #{_lambda_.1} parent=11 // pred_check
        %p402 = pneg %p216
      $region22: #{_lambda_.1} parent=11 // pred_check_branch
        %404 = sbr.rel (%p402) target = $region24
      $region23: #{_lambda_.1} parent=11 // pred_region
        %s405 = sadd.s32 %s28, 2
        %s406 = smul.u32 %s405, 2
        %s407 = smul.u32 2, %s406
        %p408 = scmp.lt.s32.totalorder %s407, 11
        %s409 = scalar_select %p408, %s407, 11
        %s410 = scalar_lea.vmem %s5, %s409
        %s411 = sadd.s32 %s28, 2
        %s412 = smul.u32 %s411, 2
        %s413 = smul.u32 2, %s412
      $region24: #{_lambda_.1} parent=11 // pred_fallthru
        _
      // Predicated region
      $region25: #{_lambda_.1} parent=11 // pred_check
        %p414 = pneg %p237
      $region26: #{_lambda_.1} parent=11 // pred_check_branch
        %416 = sbr.rel (%p414) target = $region28
      $region27: #{_lambda_.1} parent=11 // pred_region
        _
      $region28: #{_lambda_.1} parent=11 // pred_fallthru
        _
      // Predicated region
      $region29: #{_lambda_.1} parent=11 // pred_check
        %p417 = pneg %p258
      $region30: #{_lambda_.1} parent=11 // pred_check_branch
        %419 = sbr.rel (%p417) target = $region32
      $region31: #{_lambda_.1} parent=11 // pred_region
        _
      $region32: #{_lambda_.1} parent=11 // pred_fallthru
        _
      // Predicated region
      $region33: #{_lambda_.1} parent=11 // pred_check
        %p420 = pneg %p279
      $region34: #{_lambda_.1} parent=11 // pred_check_branch
        %422 = sbr.rel (%p420) target = $region36
      $region35: #{_lambda_.1} parent=11 // pred_region
        _
      $region36: #{_lambda_.1} parent=11 // pred_fallthru
        _
      // Predicated region
      $region37: #{_lambda_.1} parent=11 // pred_check
        %p423 = pneg %p300
      $region38: #{_lambda_.1} parent=11 // pred_check_branch
        %425 = sbr.rel (%p423) target = $region40
      $region39: #{_lambda_.1} parent=11 // pred_region
        _
      $region40: #{_lambda_.1} parent=11 // pred_fallthru
        _
      // Predicated region
      $region41: #{_lambda_.1} parent=11 // pred_check
        %p426 = pneg %p321
      $region42: #{_lambda_.1} parent=11 // pred_check_branch
        %428 = sbr.rel (%p426) target = $region44
      $region43: #{_lambda_.1} parent=11 // pred_region
        _
      $region44: #{_lambda_.1} parent=11 // pred_fallthru
        _
      // Predicated region
      $region45: #{_lambda_.1} parent=11 // pred_check
        %p429 = pneg %p342
      $region46: #{_lambda_.1} parent=11 // pred_check_branch
        %431 = sbr.rel (%p429) target = $region48
      $region47: #{_lambda_.1} parent=11 // pred_region
        _
      $region48: #{_lambda_.1} parent=11 // pred_fallthru
        _
    $region12: #{_lambda_.1} parent=5 // pred_fallthru
      _
    %p432 = scmp.lt.s32.totalorder %s18, 2
    // Predicated region
    $region49: #{_lambda_.1} parent=5 // pred_check
      %p433 = pneg %p432
    $region50: #{_lambda_.1} parent=5 // pred_check_branch
      %435 = sbr.rel (%p433) target = $region52
    $region51: #{_lambda_.1} parent=5 // pred_region
      // Predicated region
      $region53: #{_lambda_.1} parent=51 // pred_check
        %p436 = pneg %p54
      $region54: #{_lambda_.1} parent=51 // pred_check_branch
        %438 = sbr.rel (%p436) target = $region56
      $region55: #{_lambda_.1} parent=51 // pred_region
        %s439 = sadd.s32 %s26, 1
        %s440 = smul.u32 4, %s439
        %p441 = scmp.lt.s32.totalorder %s25, 1
        %s442 = scalar_select %p441, %s25, 1
        %p443 = scmp.lt.s32.totalorder %s440, 11
        %s444 = scalar_select %p443, %s440, 11
        %s445 = smul.addr %s442, 12
        %s446 = sadd.s32 %s444, %s445
        %s447 = smul.addr %s446, 4
        %s448 = scalar_lea.vmem %s0, %s447
        %s449 = sadd.s32 %s26, 1
        %s450 = smul.u32 4, %s449
      $region56: #{_lambda_.1} parent=51 // pred_fallthru
        _
      // Predicated region
      $region57: #{_lambda_.1} parent=51 // pred_check
        %p451 = pneg %p88
      $region58: #{_lambda_.1} parent=51 // pred_check_branch
        %453 = sbr.rel (%p451) target = $region60
      $region59: #{_lambda_.1} parent=51 // pred_region
        %s454 = sadd.s32 %s26, 1
        %s455 = smul.u32 %s454, 2
        %s456 = ssub.s32 %s455, 1
        %s457 = smul.u32 2, %s456
        %p458 = scmp.lt.s32.totalorder %s25, 1
        %s459 = scalar_select %p458, %s25, 1
        %p460 = scmp.lt.s32.totalorder %s457, 11
        %s461 = scalar_select %p460, %s457, 11
        %s462 = smul.addr %s459, 12
        %s463 = sadd.s32 %s461, %s462
        %s464 = smul.addr %s463, 4
        %s465 = scalar_lea.vmem %s1, %s464
        %s466 = sadd.s32 %s26, 1
        %s467 = smul.u32 %s466, 2
        %s468 = ssub.s32 %s467, 1
        %s469 = smul.u32 2, %s468
      $region60: #{_lambda_.1} parent=51 // pred_fallthru
        _
      // Predicated region
      $region61: #{_lambda_.1} parent=51 // pred_check
        %p470 = pneg %p120
      $region62: #{_lambda_.1} parent=51 // pred_check_branch
        %472 = sbr.rel (%p470) target = $region64
      $region63: #{_lambda_.1} parent=51 // pred_region
        %s473 = sadd.s32 %s26, 2
        %s474 = smul.u32 %s473, 2
        %s475 = smul.u32 2, %s474
        %p476 = scmp.lt.s32.totalorder %s25, 1
        %s477 = scalar_select %p476, %s25, 1
        %p478 = scmp.lt.s32.totalorder %s475, 11
        %s479 = scalar_select %p478, %s475, 11
        %s480 = smul.addr %s477, 12
        %s481 = sadd.s32 %s479, %s480
        %s482 = smul.addr %s481, 4
        %s483 = scalar_lea.vmem %s2, %s482
        %s484 = sadd.s32 %s26, 2
        %s485 = smul.u32 %s484, 2
        %s486 = smul.u32 2, %s485
      $region64: #{_lambda_.1} parent=51 // pred_fallthru
        _
    $region52: #{_lambda_.1} parent=5 // pred_fallthru
      _
    %p487 = scmp.le.s32.totalorder 1, %s18
    %p488 = scmp.lt.s32.totalorder %s18, 3
    %p489 = pnand %p487, %p488
    %p490 = pneg %p489
    // Predicated region
    $region65: #{_lambda_.1} parent=5 // pred_check
      _
    $region66: #{_lambda_.1} parent=5 // pred_check_branch
      %492 = sbr.rel (%p489) target = $region68
    $region67: #{_lambda_.1} parent=5 // pred_region
      %s493 = ssub.s32 %s18, 1
      %s494 = sadd.s32 %s28, 1
      %s495 = smul.u32 4, %s494
      %p496 = scmp.lt.s32.totalorder %s27, 1
      %s497 = scalar_select %p496, %s27, 1
      %p498 = scmp.lt.s32.totalorder %s495, 11
      %s499 = scalar_select %p498, %s495, 11
      %s500 = smul.addr %s497, 12
      %s501 = sadd.s32 %s499, %s500
      %s502 = smul.addr %s501, 4
      %s503 = scalar_lea.vmem %s0, %s502
      %p504 = pneg %p60
      %p505 = pneg %p57
      %s506 = sadd.s32 %s28, 1
      %s507 = smul.u32 %s506, 2
      %s508 = ssub.s32 %s507, 1
      %s509 = smul.u32 2, %s508
      %p510 = scmp.lt.s32.totalorder %s27, 1
      %s511 = scalar_select %p510, %s27, 1
      %p512 = scmp.lt.s32.totalorder %s509, 11
      %s513 = scalar_select %p512, %s509, 11
      %s514 = smul.addr %s511, 12
      %s515 = sadd.s32 %s513, %s514
      %s516 = smul.addr %s515, 4
      %s517 = scalar_lea.vmem %s1, %s516
      %p518 = pneg %p94
      %p519 = pneg %p91
      %s520 = sadd.s32 %s28, 2
      %s521 = smul.u32 %s520, 2
      %s522 = smul.u32 2, %s521
      %p523 = scmp.lt.s32.totalorder %s27, 1
      %s524 = scalar_select %p523, %s27, 1
      %p525 = scmp.lt.s32.totalorder %s522, 11
      %s526 = scalar_select %p525, %s522, 11
      %s527 = smul.addr %s524, 12
      %s528 = sadd.s32 %s526, %s527
      %s529 = smul.addr %s528, 4
      %s530 = scalar_lea.vmem %s2, %s529
      %p531 = pneg %p126
      %p532 = pneg %p123
      %s533 = sadd.s32 %s28, 1
      %s534 = smul.u32 4, %s533
      %p535 = scmp.lt.s32.totalorder %s534, 11
      %s536 = scalar_select %p535, %s534, 11
      %s537 = scalar_lea.vmem %s3, %s536
      %p538 = pneg %p154
      %p539 = pneg %p151
      %s540 = sadd.s32 %s28, 1
      %s541 = smul.u32 %s540, 2
      %s542 = ssub.s32 %s541, 1
      %s543 = smul.u32 2, %s542
      %p544 = scmp.lt.s32.totalorder %s543, 11
      %s545 = scalar_select %p544, %s543, 11
      %s546 = scalar_lea.vmem %s4, %s545
      %p547 = pneg %p186
      %p548 = pneg %p183
      %s549 = sadd.s32 %s28, 2
      %s550 = smul.u32 %s549, 2
      %s551 = smul.u32 2, %s550
      %p552 = scmp.lt.s32.totalorder %s551, 11
      %s553 = scalar_select %p552, %s551, 11
      %s554 = scalar_lea.vmem %s5, %s553
      %p555 = pneg %p216
      %p556 = pneg %p213
      %p557 = pneg %p237
      %p558 = pneg %p234
      %p559 = pneg %p258
      %p560 = pneg %p255
      %p561 = pneg %p279
      %p562 = pneg %p276
      %p563 = pneg %p300
      %p564 = pneg %p297
      %p565 = pneg %p321
      %p566 = pneg %p318
      %p567 = pneg %p342
      %p568 = pneg %p339
      %p569 = pneg %p363
      %p570 = pneg %p360
      %s571 = sadd.s32 %s28, 1
      %s572 = smul.u32 4, %s571
      %p573 = scmp.lt.s32.totalorder %s27, 1
      %s574 = scalar_select %p573, %s27, 1
      %p575 = scmp.lt.s32.totalorder %s572, 11
      %s576 = scalar_select %p575, %s572, 11
      %s577 = smul.addr %s574, 12
      %s578 = sadd.s32 %s576, %s577
      %s579 = smul.addr %s578, 4
      %s580 = scalar_lea.vmem %s0, %s579
      %s581 = sadd.s32 %s28, 1
      %s582 = smul.u32 4, %s581
      %s583 = sadd.s32 %s28, 1
      %s584 = smul.u32 %s583, 2
      %s585 = ssub.s32 %s584, 1
      %s586 = smul.u32 2, %s585
      %p587 = scmp.lt.s32.totalorder %s27, 1
      %s588 = scalar_select %p587, %s27, 1
      %p589 = scmp.lt.s32.totalorder %s586, 11
      %s590 = scalar_select %p589, %s586, 11
      %s591 = smul.addr %s588, 12
      %s592 = sadd.s32 %s590, %s591
      %s593 = smul.addr %s592, 4
      %s594 = scalar_lea.vmem %s1, %s593
      %s595 = sadd.s32 %s28, 1
      %s596 = smul.u32 %s595, 2
      %s597 = ssub.s32 %s596, 1
      %s598 = smul.u32 2, %s597
      %s599 = sadd.s32 %s28, 2
      %s600 = smul.u32 %s599, 2
      %s601 = smul.u32 2, %s600
      %p602 = scmp.lt.s32.totalorder %s27, 1
      %s603 = scalar_select %p602, %s27, 1
      %p604 = scmp.lt.s32.totalorder %s601, 11
      %s605 = scalar_select %p604, %s601, 11
      %s606 = smul.addr %s603, 12
      %s607 = sadd.s32 %s605, %s606
      %s608 = smul.addr %s607, 4
      %s609 = scalar_lea.vmem %s2, %s608
      %s610 = sadd.s32 %s28, 2
      %s611 = smul.u32 %s610, 2
      %s612 = smul.u32 2, %s611
      %s613 = sadd.s32 %s28, 1
      %s614 = smul.u32 4, %s613
      %p615 = scmp.lt.s32.totalorder %s614, 11
      %s616 = scalar_select %p615, %s614, 11
      %s617 = scalar_lea.vmem %s3, %s616
      %s618 = sadd.s32 %s28, 1
      %s619 = smul.u32 4, %s618
      %s620 = sadd.s32 %s28, 1
      %s621 = smul.u32 %s620, 2
      %s622 = ssub.s32 %s621, 1
      %s623 = smul.u32 2, %s622
      %p624 = scmp.lt.s32.totalorder %s623, 11
      %s625 = scalar_select %p624, %s623, 11
      %s626 = scalar_lea.vmem %s4, %s625
      %s627 = sadd.s32 %s28, 1
      %s628 = smul.u32 %s627, 2
      %s629 = ssub.s32 %s628, 1
      %s630 = smul.u32 2, %s629
      %s631 = sadd.s32 %s28, 2
      %s632 = smul.u32 %s631, 2
      %s633 = smul.u32 2, %s632
      %p634 = scmp.lt.s32.totalorder %s633, 11
      %s635 = scalar_select %p634, %s633, 11
      %s636 = scalar_lea.vmem %s5, %s635
      %s637 = sadd.s32 %s28, 2
      %s638 = smul.u32 %s637, 2
      %s639 = smul.u32 2, %s638
      %p641 = scmp.eq.s32.totalorder %s27, 0
      %p642 = scmp.eq.s32.totalorder %s28, 0
      %p643 = pnand %p641, %p642
      %p644 = pneg %p643
      // Predicated region
      $region69: #{_lambda_.1} parent=67 // pred_check
        _
      $region70: #{_lambda_.1} parent=67 // pred_check_branch
        %646 = sbr.rel (%p643) target = $region72
      $region71: #{_lambda_.1} parent=67 // pred_region
        %vm647 = vcmask 15360
        %648 = vst.msk [vmem:[#allocation2] sm:$0xff] %vm647, 0.0
        %649 = vst.msk [vmem:[#allocation2 + $0x8] sm:$0xff] %vm647, 0.0
        %650 = vst.msk [vmem:[#allocation2 + $0x10] sm:$0xff] %vm647, 0.0
        %651 = vst.msk [vmem:[#allocation2 + $0x18] sm:$0xff] %vm647, 0.0
      $region72: #{_lambda_.1} parent=67 // pred_fallthru
        _
      %v652 = vld [vmem:[%s594] sm:$0xff]
      %v653 = vld [vmem:[%s580] sm:$0xff]
      %v654 = vld [vmem:[%s580 + $0x8] sm:$0xff]
      %v655 = vld [vmem:[%s609] sm:$0xff]
      %v657 = vunpack.c.l.b16 %v652
      %v658 = vunpack.c.h.b16 %v652
      %v659 = vpack.c.b16 %v657, %v657
      %v660 = vpack.c.b16 %v658, %v658
      %v665 = vunpack.c.l.b16 %v653
      %v666 = vunpack.c.h.b16 %v653
      %v667 = vunpack.c.l.b16 %v654
      %v668 = vunpack.c.h.b16 %v654
      %v669 = vpack.c.b16 %v665, %v665
      %v670 = vpack.c.b16 %v666, %v666
      %v671 = vpack.c.b16 %v667, %v667
      %v672 = vpack.c.b16 %v668, %v668
      %v678 = vunpack.c.l.b16 %v655
      %v679 = vunpack.c.h.b16 %v655
      %v680 = vpack.c.b16 %v678, %v678
      %v681 = vpack.c.b16 %v679, %v679
      %v684 = vunpack.c.l.bf16 %v659
      %v685 = vunpack.c.l.bf16 %v660
      %v686 = vunpack.c.l.bf16 %v669
      %v687 = vunpack.c.l.bf16 %v670
      %v688 = vunpack.c.l.bf16 %v671
      %v689 = vunpack.c.l.bf16 %v672
      %v690 = vunpack.c.l.bf16 %v680
      %v691 = vunpack.c.l.bf16 %v681
      %v692 = vld [vmem:[%s626] sm:$0x3]
      %v693 = vld [vmem:[%s617] sm:$0xf]
      %v694 = vld [vmem:[%s636] sm:$0x3]
      %v696 = vlaneseq
      %v697 = vshrl.u32 %v696, 7
      %v698 = vsub.s32 1, %v697
      %v699 = vrot.slane %v692, %v698
      %v702 = vlaneseq
      %v703 = vshrl.u32 %v702, 7
      %v704 = vsub.s32 0, %v703
      %v705 = vrot.slane %v693, %v704
      %v706 = vlaneseq
      %v707 = vshrl.u32 %v706, 7
      %v708 = vsub.s32 1, %v707
      %v709 = vrot.slane %v693, %v708
      %v710 = vlaneseq
      %v711 = vshrl.u32 %v710, 7
      %v712 = vsub.s32 2, %v711
      %v713 = vrot.slane %v693, %v712
      %v714 = vlaneseq
      %v715 = vshrl.u32 %v714, 7
      %v716 = vsub.s32 3, %v715
      %v717 = vrot.slane %v693, %v716
      %v723 = vlaneseq
      %v724 = vshrl.u32 %v723, 7
      %v725 = vsub.s32 0, %v724
      %v726 = vrot.slane %v694, %v725
      %735 = vrot.lane.b32.xlu0 %v684, 127
      %v736 = vpop.permute.xlu0 %735
      %737 = vrot.lane.b32.xlu0 %v685, 127
      %v738 = vpop.permute.xlu0 %737
      %739 = vrot.lane.b32.xlu0 %v686, 127
      %v740 = vpop.permute.xlu0 %739
      %741 = vrot.lane.b32.xlu0 %v687, 127
      %v742 = vpop.permute.xlu0 %741
      %743 = vrot.lane.b32.xlu0 %v688, 127
      %v744 = vpop.permute.xlu0 %743
      %745 = vrot.lane.b32.xlu0 %v689, 127
      %v746 = vpop.permute.xlu0 %745
      %747 = vrot.lane.b32.xlu0 %v690, 127
      %v748 = vpop.permute.xlu0 %747
      %vm749 = vcmask 1039360
      %v750 = vsel %vm749, %v736, %v738
      %v751 = vsel %vm749, %v738, %v740
      %v752 = vsel %vm749, %v740, %v742
      %v753 = vsel %vm749, %v742, %v744
      %v754 = vsel %vm749, %v744, %v746
      %v755 = vsel %vm749, %v746, %v748
      %763 = vrot.lane.b32.xlu0 %v684, 126
      %v764 = vpop.permute.xlu0 %763
      %765 = vrot.lane.b32.xlu0 %v685, 126
      %v766 = vpop.permute.xlu0 %765
      %767 = vrot.lane.b32.xlu0 %v686, 126
      %v768 = vpop.permute.xlu0 %767
      %769 = vrot.lane.b32.xlu0 %v687, 126
      %v770 = vpop.permute.xlu0 %769
      %771 = vrot.lane.b32.xlu0 %v688, 126
      %v772 = vpop.permute.xlu0 %771
      %773 = vrot.lane.b32.xlu0 %v689, 126
      %v774 = vpop.permute.xlu0 %773
      %775 = vrot.lane.b32.xlu0 %v690, 126
      %v776 = vpop.permute.xlu0 %775
      %vm777 = vcmask 1031168
      %v778 = vsel %vm777, %v764, %v766
      %v779 = vsel %vm777, %v766, %v768
      %v780 = vsel %vm777, %v768, %v770
      %v781 = vsel %vm777, %v770, %v772
      %v782 = vsel %vm777, %v772, %v774
      %v783 = vsel %vm777, %v774, %v776
      %791 = vrot.lane.b32.xlu0 %v684, 110
      %v792 = vpop.permute.xlu0 %791
      %793 = vrot.lane.b32.xlu0 %v685, 110
      %v794 = vpop.permute.xlu0 %793
      %795 = vrot.lane.b32.xlu0 %v686, 110
      %v796 = vpop.permute.xlu0 %795
      %797 = vrot.lane.b32.xlu0 %v687, 110
      %v798 = vpop.permute.xlu0 %797
      %799 = vrot.lane.b32.xlu0 %v688, 110
      %v800 = vpop.permute.xlu0 %799
      %801 = vrot.lane.b32.xlu0 %v689, 110
      %v802 = vpop.permute.xlu0 %801
      %803 = vrot.lane.b32.xlu0 %v690, 110
      %v804 = vpop.permute.xlu0 %803
      %vm805 = vcmask 900096
      %v806 = vsel %vm805, %v792, %v794
      %v807 = vsel %vm805, %v794, %v796
      %v808 = vsel %vm805, %v796, %v798
      %v809 = vsel %vm805, %v798, %v800
      %v810 = vsel %vm805, %v800, %v802
      %v811 = vsel %vm805, %v802, %v804
      %819 = vrot.lane.b32.xlu0 %v685, 109
      %v820 = vpop.permute.xlu0 %819
      %821 = vrot.lane.b32.xlu0 %v686, 109
      %v822 = vpop.permute.xlu0 %821
      %823 = vrot.lane.b32.xlu0 %v687, 109
      %v824 = vpop.permute.xlu0 %823
      %825 = vrot.lane.b32.xlu0 %v688, 109
      %v826 = vpop.permute.xlu0 %825
      %827 = vrot.lane.b32.xlu0 %v689, 109
      %v828 = vpop.permute.xlu0 %827
      %829 = vrot.lane.b32.xlu0 %v690, 109
      %v830 = vpop.permute.xlu0 %829
      %vm831 = vcmask 891904
      %v832 = vsel %vm831, %v820, %v822
      %v833 = vsel %vm831, %v822, %v824
      %v834 = vsel %vm831, %v824, %v826
      %v835 = vsel %vm831, %v826, %v828
      %v836 = vsel %vm831, %v828, %v830
      %845 = vrot.lane.b32.xlu0 %v685, 108
      %v846 = vpop.permute.xlu0 %845
      %847 = vrot.lane.b32.xlu0 %v686, 108
      %v848 = vpop.permute.xlu0 %847
      %849 = vrot.lane.b32.xlu0 %v687, 108
      %v850 = vpop.permute.xlu0 %849
      %851 = vrot.lane.b32.xlu0 %v688, 108
      %v852 = vpop.permute.xlu0 %851
      %853 = vrot.lane.b32.xlu0 %v689, 108
      %v854 = vpop.permute.xlu0 %853
      %855 = vrot.lane.b32.xlu0 %v690, 108
      %v856 = vpop.permute.xlu0 %855
      %857 = vrot.lane.b32.xlu0 %v691, 108
      %v858 = vpop.permute.xlu0 %857
      %vm859 = vcmask 883712
      %v860 = vsel %vm859, %v846, %v848
      %v861 = vsel %vm859, %v848, %v850
      %v862 = vsel %vm859, %v850, %v852
      %v863 = vsel %vm859, %v852, %v854
      %v864 = vsel %vm859, %v854, %v856
      %v865 = vsel %vm859, %v856, %v858
      %873 = vrot.lane.b32.xlu0 %v685, 92
      %v874 = vpop.permute.xlu0 %873
      %875 = vrot.lane.b32.xlu0 %v686, 92
      %v876 = vpop.permute.xlu0 %875
      %877 = vrot.lane.b32.xlu0 %v687, 92
      %v878 = vpop.permute.xlu0 %877
      %879 = vrot.lane.b32.xlu0 %v688, 92
      %v880 = vpop.permute.xlu0 %879
      %881 = vrot.lane.b32.xlu0 %v689, 92
      %v882 = vpop.permute.xlu0 %881
      %883 = vrot.lane.b32.xlu0 %v690, 92
      %v884 = vpop.permute.xlu0 %883
      %885 = vrot.lane.b32.xlu0 %v691, 92
      %v886 = vpop.permute.xlu0 %885
      %vm887 = vcmask 752640
      %v888 = vsel %vm887, %v874, %v876
      %v889 = vsel %vm887, %v876, %v878
      %v890 = vsel %vm887, %v878, %v880
      %v891 = vsel %vm887, %v880, %v882
      %v892 = vsel %vm887, %v882, %v884
      %v893 = vsel %vm887, %v884, %v886
      %901 = vrot.lane.b32.xlu0 %v685, 91
      %v902 = vpop.permute.xlu0 %901
      %903 = vrot.lane.b32.xlu0 %v686, 91
      %v904 = vpop.permute.xlu0 %903
      %905 = vrot.lane.b32.xlu0 %v687, 91
      %v906 = vpop.permute.xlu0 %905
      %907 = vrot.lane.b32.xlu0 %v688, 91
      %v908 = vpop.permute.xlu0 %907
      %909 = vrot.lane.b32.xlu0 %v689, 91
      %v910 = vpop.permute.xlu0 %909
      %911 = vrot.lane.b32.xlu0 %v690, 91
      %v912 = vpop.permute.xlu0 %911
      %913 = vrot.lane.b32.xlu0 %v691, 91
      %v914 = vpop.permute.xlu0 %913
      %vm915 = vcmask 744448
      %v916 = vsel %vm915, %v902, %v904
      %v917 = vsel %vm915, %v904, %v906
      %v918 = vsel %vm915, %v906, %v908
      %v919 = vsel %vm915, %v908, %v910
      %v920 = vsel %vm915, %v910, %v912
      %v921 = vsel %vm915, %v912, %v914
      %929 = vrot.lane.b32.xlu0 %v685, 90
      %v930 = vpop.permute.xlu0 %929
      %931 = vrot.lane.b32.xlu0 %v686, 90
      %v932 = vpop.permute.xlu0 %931
      %933 = vrot.lane.b32.xlu0 %v687, 90
      %v934 = vpop.permute.xlu0 %933
      %935 = vrot.lane.b32.xlu0 %v688, 90
      %v936 = vpop.permute.xlu0 %935
      %937 = vrot.lane.b32.xlu0 %v689, 90
      %v938 = vpop.permute.xlu0 %937
      %939 = vrot.lane.b32.xlu0 %v690, 90
      %v940 = vpop.permute.xlu0 %939
      %941 = vrot.lane.b32.xlu0 %v691, 90
      %v942 = vpop.permute.xlu0 %941
      %vm943 = vcmask 736256
      %v944 = vsel %vm943, %v930, %v932
      %v945 = vsel %vm943, %v932, %v934
      %v946 = vsel %vm943, %v934, %v936
      %v947 = vsel %vm943, %v936, %v938
      %v948 = vsel %vm943, %v938, %v940
      %v949 = vsel %vm943, %v940, %v942
      %v957 = vpack.c.bf16 %v750, %v684
      %v958 = vpack.c.bf16 %v751, %v685
      %v959 = vpack.c.bf16 %v752, %v686
      %v960 = vpack.c.bf16 %v753, %v687
      %v961 = vpack.c.bf16 %v754, %v688
      %v962 = vpack.c.bf16 %v755, %v689
      %v963 = vpack.c.bf16 %v748, %v690
      %v964 = vpack.c.bf16 %v806, %v778
      %v965 = vpack.c.bf16 %v807, %v779
      %v966 = vpack.c.bf16 %v808, %v780
      %v967 = vpack.c.bf16 %v809, %v781
      %v968 = vpack.c.bf16 %v810, %v782
      %v969 = vpack.c.bf16 %v811, %v783
      %v970 = vpack.c.bf16 %v804, %v776
      %v971 = vpack.c.bf16 %v846, %v820
      %v972 = vpack.c.bf16 %v860, %v832
      %v973 = vpack.c.bf16 %v861, %v833
      %v974 = vpack.c.bf16 %v862, %v834
      %v975 = vpack.c.bf16 %v863, %v835
      %v976 = vpack.c.bf16 %v864, %v836
      %v977 = vpack.c.bf16 %v865, %v830
      %v978 = vpack.c.bf16 %v902, %v874
      %v979 = vpack.c.bf16 %v916, %v888
      %v980 = vpack.c.bf16 %v917, %v889
      %v981 = vpack.c.bf16 %v918, %v890
      %v982 = vpack.c.bf16 %v919, %v891
      %v983 = vpack.c.bf16 %v920, %v892
      %v984 = vpack.c.bf16 %v921, %v893
      %v985 = vpack.c.bf16 %v930, %v930
      %v986 = vpack.c.bf16 %v944, %v944
      %v987 = vpack.c.bf16 %v945, %v945
      %v988 = vpack.c.bf16 %v946, %v946
      %v989 = vpack.c.bf16 %v947, %v947
      %v990 = vpack.c.bf16 %v948, %v948
      %v991 = vpack.c.bf16 %v949, %v949
      %v992 = vld [vmem:[%s6] sm:$0xf]
      %v993 = vld [vmem:[%s6 + $0x4] sm:$0xf]
      %v994 = vld [vmem:[%s6 + $0x8] sm:$0xf]
      %v995 = vld [vmem:[%s6 + $0xc] sm:$0xf]
      %v996 = vld [vmem:[%s7] sm:$0xff]
      %v997 = vld [vmem:[%s7 + $0x8] sm:$0xff]
      %v998 = vld [vmem:[%s7 + $0x10] sm:$0xff]
      %v999 = vld [vmem:[%s7 + $0x18] sm:$0xff]
      %1001 = vset.pattern.permute.xlu0 0
      %1002 = vperm.xlu0 %1001, %v996
      %v1003 = vpop.permute.xlu0 %1002
      %1006 = vset.pattern.permute.xlu0 0
      %1007 = vperm.xlu0 %1006, %v997
      %v1008 = vpop.permute.xlu0 %1007
      %1011 = vset.pattern.permute.xlu0 0
      %1012 = vperm.xlu0 %1011, %v998
      %v1013 = vpop.permute.xlu0 %1012
      %1016 = vset.pattern.permute.xlu0 0
      %1017 = vperm.xlu0 %1016, %v999
      %v1018 = vpop.permute.xlu0 %1017
      %v1024 = vunpack.c.l.b16 %v992
      %v1025 = vunpack.c.l.b16 %v993
      %v1026 = vunpack.c.l.b16 %v994
      %v1027 = vunpack.c.l.b16 %v995
      %v1028 = vpack.c.b16 %v1025, %v1024
      %v1029 = vpack.c.b16 %v1027, %v1026
      %1065 = vrot.lane.b32.xlu0 %v957, 19
      %v1066 = vpop.permute.xlu0 %1065
      %1067 = vrot.lane.b32.xlu0 %v958, 19
      %v1068 = vpop.permute.xlu0 %1067
      %1069 = vrot.lane.b32.xlu0 %v959, 19
      %v1070 = vpop.permute.xlu0 %1069
      %1071 = vrot.lane.b32.xlu0 %v960, 19
      %v1072 = vpop.permute.xlu0 %1071
      %1073 = vrot.lane.b32.xlu0 %v961, 19
      %v1074 = vpop.permute.xlu0 %1073
      %1075 = vrot.lane.b32.xlu0 %v962, 19
      %v1076 = vpop.permute.xlu0 %1075
      %1077 = vrot.lane.b32.xlu0 %v963, 19
      %v1078 = vpop.permute.xlu0 %1077
      %1079 = vrot.lane.b32.xlu0 %v964, 19
      %v1080 = vpop.permute.xlu0 %1079
      %1081 = vrot.lane.b32.xlu0 %v965, 19
      %v1082 = vpop.permute.xlu0 %1081
      %1083 = vrot.lane.b32.xlu0 %v966, 19
      %v1084 = vpop.permute.xlu0 %1083
      %1085 = vrot.lane.b32.xlu0 %v967, 19
      %v1086 = vpop.permute.xlu0 %1085
      %1087 = vrot.lane.b32.xlu0 %v968, 19
      %v1088 = vpop.permute.xlu0 %1087
      %1089 = vrot.lane.b32.xlu0 %v969, 19
      %v1090 = vpop.permute.xlu0 %1089
      %1091 = vrot.lane.b32.xlu0 %v970, 19
      %v1092 = vpop.permute.xlu0 %1091
      %1093 = vrot.lane.b32.xlu0 %v971, 19
      %v1094 = vpop.permute.xlu0 %1093
      %1095 = vrot.lane.b32.xlu0 %v972, 19
      %v1096 = vpop.permute.xlu0 %1095
      %1097 = vrot.lane.b32.xlu0 %v973, 19
      %v1098 = vpop.permute.xlu0 %1097
      %1099 = vrot.lane.b32.xlu0 %v974, 19
      %v1100 = vpop.permute.xlu0 %1099
      %1101 = vrot.lane.b32.xlu0 %v975, 19
      %v1102 = vpop.permute.xlu0 %1101
      %1103 = vrot.lane.b32.xlu0 %v976, 19
      %v1104 = vpop.permute.xlu0 %1103
      %1105 = vrot.lane.b32.xlu0 %v977, 19
      %v1106 = vpop.permute.xlu0 %1105
      %1107 = vrot.lane.b32.xlu0 %v978, 19
      %v1108 = vpop.permute.xlu0 %1107
      %1109 = vrot.lane.b32.xlu0 %v979, 19
      %v1110 = vpop.permute.xlu0 %1109
      %1111 = vrot.lane.b32.xlu0 %v980, 19
      %v1112 = vpop.permute.xlu0 %1111
      %1113 = vrot.lane.b32.xlu0 %v981, 19
      %v1114 = vpop.permute.xlu0 %1113
      %1115 = vrot.lane.b32.xlu0 %v982, 19
      %v1116 = vpop.permute.xlu0 %1115
      %1117 = vrot.lane.b32.xlu0 %v983, 19
      %v1118 = vpop.permute.xlu0 %1117
      %1119 = vrot.lane.b32.xlu0 %v984, 19
      %v1120 = vpop.permute.xlu0 %1119
      %1121 = vrot.lane.b32.xlu0 %v985, 19
      %v1122 = vpop.permute.xlu0 %1121
      %1123 = vrot.lane.b32.xlu0 %v986, 19
      %v1124 = vpop.permute.xlu0 %1123
      %1125 = vrot.lane.b32.xlu0 %v987, 19
      %v1126 = vpop.permute.xlu0 %1125
      %1127 = vrot.lane.b32.xlu0 %v988, 19
      %v1128 = vpop.permute.xlu0 %1127
      %1129 = vrot.lane.b32.xlu0 %v989, 19
      %v1130 = vpop.permute.xlu0 %1129
      %1131 = vrot.lane.b32.xlu0 %v990, 19
      %v1132 = vpop.permute.xlu0 %1131
      %1133 = vrot.lane.b32.xlu0 %v991, 19
      %v1134 = vpop.permute.xlu0 %1133
      %vm1135 = vcmask 154624
      %v1136 = vsel %vm1135, %v1066, %v1068
      %v1137 = vsel %vm1135, %v1068, %v1070
      %v1138 = vsel %vm1135, %v1070, %v1072
      %v1139 = vsel %vm1135, %v1072, %v1074
      %v1140 = vsel %vm1135, %v1074, %v1076
      %v1141 = vsel %vm1135, %v1076, %v1078
      %v1142 = vsel %vm1135, %v1080, %v1082
      %v1143 = vsel %vm1135, %v1082, %v1084
      %v1144 = vsel %vm1135, %v1084, %v1086
      %v1145 = vsel %vm1135, %v1086, %v1088
      %v1146 = vsel %vm1135, %v1088, %v1090
      %v1147 = vsel %vm1135, %v1090, %v1092
      %v1148 = vsel %vm1135, %v1094, %v1096
      %v1149 = vsel %vm1135, %v1096, %v1098
      %v1150 = vsel %vm1135, %v1098, %v1100
      %v1151 = vsel %vm1135, %v1100, %v1102
      %v1152 = vsel %vm1135, %v1102, %v1104
      %v1153 = vsel %vm1135, %v1104, %v1106
      %v1154 = vsel %vm1135, %v1108, %v1110
      %v1155 = vsel %vm1135, %v1110, %v1112
      %v1156 = vsel %vm1135, %v1112, %v1114
      %v1157 = vsel %vm1135, %v1114, %v1116
      %v1158 = vsel %vm1135, %v1116, %v1118
      %v1159 = vsel %vm1135, %v1118, %v1120
      %v1160 = vsel %vm1135, %v1122, %v1124
      %v1161 = vsel %vm1135, %v1124, %v1126
      %v1162 = vsel %vm1135, %v1126, %v1128
      %v1163 = vsel %vm1135, %v1128, %v1130
      %v1164 = vsel %vm1135, %v1130, %v1132
      %v1165 = vsel %vm1135, %v1132, %v1134
      %vm1190 = vcmask 588800
      %v1192 = vsel %vm1190, %v1028, 0
      %v1195 = vsel %vm1190, %v1029, 0
      %vm1197 = vcmask 1043456
      %v1199 = vsel %vm1197, %v1160, 0
      %v1202 = vsel %vm1197, %v1161, 0
      %v1205 = vsel %vm1197, %v1162, 0
      %v1208 = vsel %vm1197, %v1163, 0
      %v1211 = vsel %vm1197, %v1164, 0
      %v1214 = vsel %vm1197, %v1165, 0
      %1216 = vmatprep.subr.bf16.mxu0 0
      %1217 = vmatpush1.bf16.msra.mxu0 0
      %1218 = vmatprep.subr.bf16.mxu0 0
      %1219 = vmatpush1.bf16.msra.mxu0 0
      %1220 = vmatprep.subr.bf16.mxu0 0
      %1221 = vmatpush1.bf16.msra.mxu0 0
      %1222 = vmatprep.subr.bf16.mxu0 %v1202
      %1223 = vmatpush1.bf16.msra.mxu0 %v1199
      %1224 = vmatprep.subr.bf16.mxu0 %v1155
      %1225 = vmatpush1.bf16.msra.mxu0 %v1154
      %1226 = vmatprep.subr.bf16.mxu0 %v1149
      %1227 = vmatpush1.bf16.msra.mxu0 %v1148
      %1228 = vmatprep.subr.bf16.mxu0 %v1143
      %1229 = vmatpush1.bf16.msra.mxu0 %v1142
      %1230 = vmatprep.subr.bf16.mxu0 %v1137
      %1231 = vmatpush1.bf16.msra.mxu0 %v1136
      %1232 = vmatprep.subr.bf16.mxu0 0
      %1233 = vmatpush2.bf16.msra.mxu0 0
      %1234 = vmatprep.subr.bf16.mxu0 0
      %1235 = vmatpush2.bf16.msra.mxu0 0
      %1236 = vmatprep.subr.bf16.mxu0 0
      %1237 = vmatpush2.bf16.msra.mxu0 0
      %1238 = vmatprep.subr.bf16.mxu0 0
      %1239 = vmatpush2.bf16.msra.mxu0 0
      %1240 = vmatprep.subr.bf16.mxu0 0
      %1241 = vmatpush2.bf16.msra.mxu0 0
      %1242 = vmatprep.subr.bf16.mxu0 0
      %1243 = vmatpush2.bf16.msra.mxu0 0
      %1244 = vmatprep.subr.bf16.mxu0 0
      %1245 = vmatpush2.bf16.msra.mxu0 0
      %1246 = vmatprep.subr.bf16.mxu0 0
      %1247 = vmatpush2.bf16.msra.mxu0 0
      %1248 = vmatprep.mubr.bf16.mxu0 0
      %1249 = vmatmul.mubr.bf16.gmra.mxu0 %v1192
      %v1250 = vpop.f32.mrf.mxu0
      %v1251 = vadd.f32 %v1003, %v1250
      %v1252 = vpop.f32.mrf.mxu0
      %v1253 = vadd.f32 %v1003, %v1252
      %v1254 = vpop.f32.mrf.mxu0
      %v1255 = vadd.f32 %v1008, %v1254
      %v1256 = vpop.f32.mrf.mxu0
      %v1257 = vadd.f32 %v1008, %v1256
      %1258 = vmatprep.mubr.bf16.mxu0 0
      %1259 = vmatmul.mubr.bf16.gmra.mxu0 %v1195
      %v1260 = vpop.f32.mrf.mxu0
      %v1261 = vadd.f32 %v1013, %v1260
      %v1262 = vpop.f32.mrf.mxu0
      %v1263 = vadd.f32 %v1013, %v1262
      %v1264 = vpop.f32.mrf.mxu0
      %v1265 = vadd.f32 %v1018, %v1264
      %v1266 = vpop.f32.mrf.mxu0
      %v1267 = vadd.f32 %v1018, %v1266
      %1268 = vdwg.mxu0
      %1269 = vmatprep.subr.bf16.mxu0 0
      %1270 = vmatpush1.bf16.msra.mxu0 0
      %1271 = vmatprep.subr.bf16.mxu0 0
      %1272 = vmatpush1.bf16.msra.mxu0 0
      %1273 = vmatprep.subr.bf16.mxu0 0
      %1274 = vmatpush1.bf16.msra.mxu0 0
      %1275 = vmatprep.subr.bf16.mxu0 %v1208
      %1276 = vmatpush1.bf16.msra.mxu0 %v1205
      %1277 = vmatprep.subr.bf16.mxu0 %v1157
      %1278 = vmatpush1.bf16.msra.mxu0 %v1156
      %1279 = vmatprep.subr.bf16.mxu0 %v1151
      %1280 = vmatpush1.bf16.msra.mxu0 %v1150
      %1281 = vmatprep.subr.bf16.mxu0 %v1145
      %1282 = vmatpush1.bf16.msra.mxu0 %v1144
      %1283 = vmatprep.subr.bf16.mxu0 %v1139
      %1284 = vmatpush1.bf16.msra.mxu0 %v1138
      %1285 = vmatprep.subr.bf16.mxu0 0
      %1286 = vmatpush2.bf16.msra.mxu0 0
      %1287 = vmatprep.subr.bf16.mxu0 0
      %1288 = vmatpush2.bf16.msra.mxu0 0
      %1289 = vmatprep.subr.bf16.mxu0 0
      %1290 = vmatpush2.bf16.msra.mxu0 0
      %1291 = vmatprep.subr.bf16.mxu0 0
      %1292 = vmatpush2.bf16.msra.mxu0 0
      %1293 = vmatprep.subr.bf16.mxu0 0
      %1294 = vmatpush2.bf16.msra.mxu0 0
      %1295 = vmatprep.subr.bf16.mxu0 0
      %1296 = vmatpush2.bf16.msra.mxu0 0
      %1297 = vmatprep.subr.bf16.mxu0 0
      %1298 = vmatpush2.bf16.msra.mxu0 0
      %1299 = vmatprep.subr.bf16.mxu0 0
      %1300 = vmatpush2.bf16.msra.mxu0 0
      %1301 = vmatprep.mubr.bf16.mxu0 0
      %1302 = vmatmul.mubr.bf16.gmra.mxu0 %v1192
      %v1303 = vpop.f32.mrf.mxu0
      %v1304 = vadd.f32 %v1003, %v1303
      %v1305 = vpop.f32.mrf.mxu0
      %v1306 = vadd.f32 %v1003, %v1305
      %v1307 = vpop.f32.mrf.mxu0
      %v1308 = vadd.f32 %v1008, %v1307
      %v1309 = vpop.f32.mrf.mxu0
      %v1310 = vadd.f32 %v1008, %v1309
      %1311 = vmatprep.mubr.bf16.mxu0 0
      %1312 = vmatmul.mubr.bf16.gmra.mxu0 %v1195
      %v1313 = vpop.f32.mrf.mxu0
      %v1314 = vadd.f32 %v1013, %v1313
      %v1315 = vpop.f32.mrf.mxu0
      %v1316 = vadd.f32 %v1013, %v1315
      %v1317 = vpop.f32.mrf.mxu0
      %v1318 = vadd.f32 %v1018, %v1317
      %v1319 = vpop.f32.mrf.mxu0
      %v1320 = vadd.f32 %v1018, %v1319
      %1321 = vdwg.mxu0
      %1322 = vmatprep.subr.bf16.mxu0 0
      %1323 = vmatpush1.bf16.msra.mxu0 0
      %1324 = vmatprep.subr.bf16.mxu0 0
      %1325 = vmatpush1.bf16.msra.mxu0 0
      %1326 = vmatprep.subr.bf16.mxu0 0
      %1327 = vmatpush1.bf16.msra.mxu0 0
      %1328 = vmatprep.subr.bf16.mxu0 %v1214
      %1329 = vmatpush1.bf16.msra.mxu0 %v1211
      %1330 = vmatprep.subr.bf16.mxu0 %v1159
      %1331 = vmatpush1.bf16.msra.mxu0 %v1158
      %1332 = vmatprep.subr.bf16.mxu0 %v1153
      %1333 = vmatpush1.bf16.msra.mxu0 %v1152
      %1334 = vmatprep.subr.bf16.mxu0 %v1147
      %1335 = vmatpush1.bf16.msra.mxu0 %v1146
      %1336 = vmatprep.subr.bf16.mxu0 %v1141
      %1337 = vmatpush1.bf16.msra.mxu0 %v1140
      %1338 = vmatprep.subr.bf16.mxu0 0
      %1339 = vmatpush2.bf16.msra.mxu0 0
      %1340 = vmatprep.subr.bf16.mxu0 0
      %1341 = vmatpush2.bf16.msra.mxu0 0
      %1342 = vmatprep.subr.bf16.mxu0 0
      %1343 = vmatpush2.bf16.msra.mxu0 0
      %1344 = vmatprep.subr.bf16.mxu0 0
      %1345 = vmatpush2.bf16.msra.mxu0 0
      %1346 = vmatprep.subr.bf16.mxu0 0
      %1347 = vmatpush2.bf16.msra.mxu0 0
      %1348 = vmatprep.subr.bf16.mxu0 0
      %1349 = vmatpush2.bf16.msra.mxu0 0
      %1350 = vmatprep.subr.bf16.mxu0 0
      %1351 = vmatpush2.bf16.msra.mxu0 0
      %1352 = vmatprep.subr.bf16.mxu0 0
      %1353 = vmatpush2.bf16.msra.mxu0 0
      %1354 = vmatprep.mubr.bf16.mxu0 0
      %1355 = vmatmul.mubr.bf16.gmra.mxu0 %v1192
      %v1356 = vpop.f32.mrf.mxu0
      %v1357 = vadd.f32 %v1003, %v1356
      %v1358 = vpop.f32.mrf.mxu0
      %v1359 = vadd.f32 %v1003, %v1358
      %v1360 = vpop.f32.mrf.mxu0
      %v1361 = vadd.f32 %v1008, %v1360
      %v1362 = vpop.f32.mrf.mxu0
      %v1363 = vadd.f32 %v1008, %v1362
      %1364 = vmatprep.mubr.bf16.mxu0 0
      %1365 = vmatmul.mubr.bf16.gmra.mxu0 %v1195
      %v1366 = vpop.f32.mrf.mxu0
      %v1367 = vadd.f32 %v1013, %v1366
      %v1368 = vpop.f32.mrf.mxu0
      %v1369 = vadd.f32 %v1013, %v1368
      %v1370 = vpop.f32.mrf.mxu0
      %v1371 = vadd.f32 %v1018, %v1370
      %v1372 = vpop.f32.mrf.mxu0
      %v1373 = vadd.f32 %v1018, %v1372
      %1374 = vdwg.mxu0
      %v1375 = vmax.f32 %v1251, 0.0
      %v1376 = vmax.f32 %v1253, 0.0
      %v1377 = vmax.f32 %v1304, 0.0
      %v1378 = vmax.f32 %v1306, 0.0
      %v1379 = vmax.f32 %v1357, 0.0
      %v1380 = vmax.f32 %v1359, 0.0
      %v1381 = vmax.f32 %v1255, 0.0
      %v1382 = vmax.f32 %v1257, 0.0
      %v1383 = vmax.f32 %v1308, 0.0
      %v1384 = vmax.f32 %v1310, 0.0
      %v1385 = vmax.f32 %v1361, 0.0
      %v1386 = vmax.f32 %v1363, 0.0
      %v1387 = vmax.f32 %v1261, 0.0
      %v1388 = vmax.f32 %v1263, 0.0
      %v1389 = vmax.f32 %v1314, 0.0
      %v1390 = vmax.f32 %v1316, 0.0
      %v1391 = vmax.f32 %v1367, 0.0
      %v1392 = vmax.f32 %v1369, 0.0
      %v1393 = vmax.f32 %v1265, 0.0
      %v1394 = vmax.f32 %v1267, 0.0
      %v1395 = vmax.f32 %v1318, 0.0
      %v1396 = vmax.f32 %v1320, 0.0
      %v1397 = vmax.f32 %v1371, 0.0
      %v1398 = vmax.f32 %v1373, 0.0
      %v1399 = vlaneseq
      %v1400 = vshrl.u32 %v1399, 7
      %v1401 = vsub.s32 0, %v1400
      %v1402 = vrot.slane %v699, %v1401
      %v1403 = vlaneseq
      %v1404 = vshrl.u32 %v1403, 7
      %v1405 = vsub.s32 0, %v1404
      %v1406 = vrot.slane %v705, %v1405
      %v1407 = vlaneseq
      %v1408 = vshrl.u32 %v1407, 7
      %v1409 = vsub.s32 0, %v1408
      %v1410 = vrot.slane %v709, %v1409
      %v1411 = vlaneseq
      %v1412 = vshrl.u32 %v1411, 7
      %v1413 = vsub.s32 0, %v1412
      %v1414 = vrot.slane %v713, %v1413
      %v1415 = vlaneseq
      %v1416 = vshrl.u32 %v1415, 7
      %v1417 = vsub.s32 0, %v1416
      %v1418 = vrot.slane %v717, %v1417
      %v1419 = vlaneseq
      %v1420 = vshrl.u32 %v1419, 7
      %v1421 = vsub.s32 0, %v1420
      %v1422 = vrot.slane %v726, %v1421
      %v1423 = vmul.f32 %v1375, %v1402
      %v1424 = vmul.f32 %v1376, %v1406
      %v1425 = vmul.f32 %v1377, %v1410
      %v1426 = vmul.f32 %v1378, %v1414
      %v1427 = vmul.f32 %v1379, %v1418
      %v1428 = vmul.f32 %v1380, %v1422
      %v1429 = vmul.f32 %v1381, %v1402
      %v1430 = vmul.f32 %v1382, %v1406
      %v1431 = vmul.f32 %v1383, %v1410
      %v1432 = vmul.f32 %v1384, %v1414
      %v1433 = vmul.f32 %v1385, %v1418
      %v1434 = vmul.f32 %v1386, %v1422
      %v1435 = vmul.f32 %v1387, %v1402
      %v1436 = vmul.f32 %v1388, %v1406
      %v1437 = vmul.f32 %v1389, %v1410
      %v1438 = vmul.f32 %v1390, %v1414
      %v1439 = vmul.f32 %v1391, %v1418
      %v1440 = vmul.f32 %v1392, %v1422
      %v1441 = vmul.f32 %v1393, %v1402
      %v1442 = vmul.f32 %v1394, %v1406
      %v1443 = vmul.f32 %v1395, %v1410
      %v1444 = vmul.f32 %v1396, %v1414
      %v1445 = vmul.f32 %v1397, %v1418
      %v1446 = vmul.f32 %v1398, %v1422
      %v1447 = vpack.c.bf16 %v1429, %v1423
      %v1448 = vpack.c.bf16 %v1430, %v1424
      %v1449 = vpack.c.bf16 %v1431, %v1425
      %v1450 = vpack.c.bf16 %v1432, %v1426
      %v1451 = vpack.c.bf16 %v1433, %v1427
      %v1452 = vpack.c.bf16 %v1434, %v1428
      %v1453 = vpack.c.bf16 %v1441, %v1435
      %v1454 = vpack.c.bf16 %v1442, %v1436
      %v1455 = vpack.c.bf16 %v1443, %v1437
      %v1456 = vpack.c.bf16 %v1444, %v1438
      %v1457 = vpack.c.bf16 %v1445, %v1439
      %v1458 = vpack.c.bf16 %v1446, %v1440
      %1469 = vrot.lane.b32.xlu0 %v1447, 127
      %v1470 = vpop.permute.xlu0 %1469
      %1471 = vrot.lane.b32.xlu0 %v1448, 127
      %v1472 = vpop.permute.xlu0 %1471
      %1473 = vrot.lane.b32.xlu0 %v1449, 127
      %v1474 = vpop.permute.xlu0 %1473
      %1475 = vrot.lane.b32.xlu0 %v1450, 127
      %v1476 = vpop.permute.xlu0 %1475
      %1477 = vrot.lane.b32.xlu0 %v1451, 127
      %v1478 = vpop.permute.xlu0 %1477
      %1479 = vrot.lane.b32.xlu0 %v1453, 127
      %v1480 = vpop.permute.xlu0 %1479
      %1481 = vrot.lane.b32.xlu0 %v1454, 127
      %v1482 = vpop.permute.xlu0 %1481
      %1483 = vrot.lane.b32.xlu0 %v1455, 127
      %v1484 = vpop.permute.xlu0 %1483
      %1485 = vrot.lane.b32.xlu0 %v1456, 127
      %v1486 = vpop.permute.xlu0 %1485
      %1487 = vrot.lane.b32.xlu0 %v1457, 127
      %v1488 = vpop.permute.xlu0 %1487
      %vm1489 = vcmask 1039360
      %v1490 = vsel %vm1489, %v1470, %v1472
      %v1491 = vsel %vm1489, %v1472, %v1474
      %v1492 = vsel %vm1489, %v1474, %v1476
      %v1493 = vsel %vm1489, %v1476, %v1478
      %v1494 = vsel %vm1489, %v1480, %v1482
      %v1495 = vsel %vm1489, %v1482, %v1484
      %v1496 = vsel %vm1489, %v1484, %v1486
      %v1497 = vsel %vm1489, %v1486, %v1488
      %1498 = vrot.lane.b32.xlu0 %v1447, 126
      %v1499 = vpop.permute.xlu0 %1498
      %1500 = vrot.lane.b32.xlu0 %v1448, 126
      %v1501 = vpop.permute.xlu0 %1500
      %1502 = vrot.lane.b32.xlu0 %v1449, 126
      %v1503 = vpop.permute.xlu0 %1502
      %1504 = vrot.lane.b32.xlu0 %v1450, 126
      %v1505 = vpop.permute.xlu0 %1504
      %1506 = vrot.lane.b32.xlu0 %v1451, 126
      %v1507 = vpop.permute.xlu0 %1506
      %1508 = vrot.lane.b32.xlu0 %v1453, 126
      %v1509 = vpop.permute.xlu0 %1508
      %1510 = vrot.lane.b32.xlu0 %v1454, 126
      %v1511 = vpop.permute.xlu0 %1510
      %1512 = vrot.lane.b32.xlu0 %v1455, 126
      %v1513 = vpop.permute.xlu0 %1512
      %1514 = vrot.lane.b32.xlu0 %v1456, 126
      %v1515 = vpop.permute.xlu0 %1514
      %1516 = vrot.lane.b32.xlu0 %v1457, 126
      %v1517 = vpop.permute.xlu0 %1516
      %vm1518 = vcmask 1031168
      %v1519 = vsel %vm1518, %v1499, %v1501
      %v1520 = vsel %vm1518, %v1501, %v1503
      %v1521 = vsel %vm1518, %v1503, %v1505
      %v1522 = vsel %vm1518, %v1505, %v1507
      %v1523 = vsel %vm1518, %v1509, %v1511
      %v1524 = vsel %vm1518, %v1511, %v1513
      %v1525 = vsel %vm1518, %v1513, %v1515
      %v1526 = vsel %vm1518, %v1515, %v1517
      %1527 = vrot.lane.b32.xlu0 %v1447, 110
      %v1528 = vpop.permute.xlu0 %1527
      %1529 = vrot.lane.b32.xlu0 %v1448, 110
      %v1530 = vpop.permute.xlu0 %1529
      %1531 = vrot.lane.b32.xlu0 %v1449, 110
      %v1532 = vpop.permute.xlu0 %1531
      %1533 = vrot.lane.b32.xlu0 %v1450, 110
      %v1534 = vpop.permute.xlu0 %1533
      %1535 = vrot.lane.b32.xlu0 %v1451, 110
      %v1536 = vpop.permute.xlu0 %1535
      %1537 = vrot.lane.b32.xlu0 %v1453, 110
      %v1538 = vpop.permute.xlu0 %1537
      %1539 = vrot.lane.b32.xlu0 %v1454, 110
      %v1540 = vpop.permute.xlu0 %1539
      %1541 = vrot.lane.b32.xlu0 %v1455, 110
      %v1542 = vpop.permute.xlu0 %1541
      %1543 = vrot.lane.b32.xlu0 %v1456, 110
      %v1544 = vpop.permute.xlu0 %1543
      %1545 = vrot.lane.b32.xlu0 %v1457, 110
      %v1546 = vpop.permute.xlu0 %1545
      %vm1547 = vcmask 900096
      %v1548 = vsel %vm1547, %v1528, %v1530
      %v1549 = vsel %vm1547, %v1530, %v1532
      %v1550 = vsel %vm1547, %v1532, %v1534
      %v1551 = vsel %vm1547, %v1534, %v1536
      %v1552 = vsel %vm1547, %v1538, %v1540
      %v1553 = vsel %vm1547, %v1540, %v1542
      %v1554 = vsel %vm1547, %v1542, %v1544
      %v1555 = vsel %vm1547, %v1544, %v1546
      %1556 = vrot.lane.b32.xlu0 %v1448, 109
      %v1557 = vpop.permute.xlu0 %1556
      %1558 = vrot.lane.b32.xlu0 %v1449, 109
      %v1559 = vpop.permute.xlu0 %1558
      %1560 = vrot.lane.b32.xlu0 %v1450, 109
      %v1561 = vpop.permute.xlu0 %1560
      %1562 = vrot.lane.b32.xlu0 %v1451, 109
      %v1563 = vpop.permute.xlu0 %1562
      %1564 = vrot.lane.b32.xlu0 %v1454, 109
      %v1565 = vpop.permute.xlu0 %1564
      %1566 = vrot.lane.b32.xlu0 %v1455, 109
      %v1567 = vpop.permute.xlu0 %1566
      %1568 = vrot.lane.b32.xlu0 %v1456, 109
      %v1569 = vpop.permute.xlu0 %1568
      %1570 = vrot.lane.b32.xlu0 %v1457, 109
      %v1571 = vpop.permute.xlu0 %1570
      %vm1572 = vcmask 891904
      %v1573 = vsel %vm1572, %v1557, %v1559
      %v1574 = vsel %vm1572, %v1559, %v1561
      %v1575 = vsel %vm1572, %v1561, %v1563
      %v1576 = vsel %vm1572, %v1565, %v1567
      %v1577 = vsel %vm1572, %v1567, %v1569
      %v1578 = vsel %vm1572, %v1569, %v1571
      %1581 = vrot.lane.b32.xlu0 %v1448, 108
      %v1582 = vpop.permute.xlu0 %1581
      %1583 = vrot.lane.b32.xlu0 %v1449, 108
      %v1584 = vpop.permute.xlu0 %1583
      %1585 = vrot.lane.b32.xlu0 %v1450, 108
      %v1586 = vpop.permute.xlu0 %1585
      %1587 = vrot.lane.b32.xlu0 %v1451, 108
      %v1588 = vpop.permute.xlu0 %1587
      %1589 = vrot.lane.b32.xlu0 %v1452, 108
      %v1590 = vpop.permute.xlu0 %1589
      %1591 = vrot.lane.b32.xlu0 %v1454, 108
      %v1592 = vpop.permute.xlu0 %1591
      %1593 = vrot.lane.b32.xlu0 %v1455, 108
      %v1594 = vpop.permute.xlu0 %1593
      %1595 = vrot.lane.b32.xlu0 %v1456, 108
      %v1596 = vpop.permute.xlu0 %1595
      %1597 = vrot.lane.b32.xlu0 %v1457, 108
      %v1598 = vpop.permute.xlu0 %1597
      %1599 = vrot.lane.b32.xlu0 %v1458, 108
      %v1600 = vpop.permute.xlu0 %1599
      %vm1601 = vcmask 883712
      %v1602 = vsel %vm1601, %v1582, %v1584
      %v1603 = vsel %vm1601, %v1584, %v1586
      %v1604 = vsel %vm1601, %v1586, %v1588
      %v1605 = vsel %vm1601, %v1588, %v1590
      %v1606 = vsel %vm1601, %v1592, %v1594
      %v1607 = vsel %vm1601, %v1594, %v1596
      %v1608 = vsel %vm1601, %v1596, %v1598
      %v1609 = vsel %vm1601, %v1598, %v1600
      %1610 = vrot.lane.b32.xlu0 %v1448, 92
      %v1611 = vpop.permute.xlu0 %1610
      %1612 = vrot.lane.b32.xlu0 %v1449, 92
      %v1613 = vpop.permute.xlu0 %1612
      %1614 = vrot.lane.b32.xlu0 %v1450, 92
      %v1615 = vpop.permute.xlu0 %1614
      %1616 = vrot.lane.b32.xlu0 %v1451, 92
      %v1617 = vpop.permute.xlu0 %1616
      %1618 = vrot.lane.b32.xlu0 %v1452, 92
      %v1619 = vpop.permute.xlu0 %1618
      %1620 = vrot.lane.b32.xlu0 %v1454, 92
      %v1621 = vpop.permute.xlu0 %1620
      %1622 = vrot.lane.b32.xlu0 %v1455, 92
      %v1623 = vpop.permute.xlu0 %1622
      %1624 = vrot.lane.b32.xlu0 %v1456, 92
      %v1625 = vpop.permute.xlu0 %1624
      %1626 = vrot.lane.b32.xlu0 %v1457, 92
      %v1627 = vpop.permute.xlu0 %1626
      %1628 = vrot.lane.b32.xlu0 %v1458, 92
      %v1629 = vpop.permute.xlu0 %1628
      %vm1630 = vcmask 752640
      %v1631 = vsel %vm1630, %v1611, %v1613
      %v1632 = vsel %vm1630, %v1613, %v1615
      %v1633 = vsel %vm1630, %v1615, %v1617
      %v1634 = vsel %vm1630, %v1617, %v1619
      %v1635 = vsel %vm1630, %v1621, %v1623
      %v1636 = vsel %vm1630, %v1623, %v1625
      %v1637 = vsel %vm1630, %v1625, %v1627
      %v1638 = vsel %vm1630, %v1627, %v1629
      %1639 = vrot.lane.b32.xlu0 %v1448, 91
      %v1640 = vpop.permute.xlu0 %1639
      %1641 = vrot.lane.b32.xlu0 %v1449, 91
      %v1642 = vpop.permute.xlu0 %1641
      %1643 = vrot.lane.b32.xlu0 %v1450, 91
      %v1644 = vpop.permute.xlu0 %1643
      %1645 = vrot.lane.b32.xlu0 %v1451, 91
      %v1646 = vpop.permute.xlu0 %1645
      %1647 = vrot.lane.b32.xlu0 %v1452, 91
      %v1648 = vpop.permute.xlu0 %1647
      %1649 = vrot.lane.b32.xlu0 %v1454, 91
      %v1650 = vpop.permute.xlu0 %1649
      %1651 = vrot.lane.b32.xlu0 %v1455, 91
      %v1652 = vpop.permute.xlu0 %1651
      %1653 = vrot.lane.b32.xlu0 %v1456, 91
      %v1654 = vpop.permute.xlu0 %1653
      %1655 = vrot.lane.b32.xlu0 %v1457, 91
      %v1656 = vpop.permute.xlu0 %1655
      %1657 = vrot.lane.b32.xlu0 %v1458, 91
      %v1658 = vpop.permute.xlu0 %1657
      %vm1659 = vcmask 744448
      %v1660 = vsel %vm1659, %v1640, %v1642
      %v1661 = vsel %vm1659, %v1642, %v1644
      %v1662 = vsel %vm1659, %v1644, %v1646
      %v1663 = vsel %vm1659, %v1646, %v1648
      %v1664 = vsel %vm1659, %v1650, %v1652
      %v1665 = vsel %vm1659, %v1652, %v1654
      %v1666 = vsel %vm1659, %v1654, %v1656
      %v1667 = vsel %vm1659, %v1656, %v1658
      %1668 = vrot.lane.b32.xlu0 %v1448, 90
      %v1669 = vpop.permute.xlu0 %1668
      %1670 = vrot.lane.b32.xlu0 %v1449, 90
      %v1671 = vpop.permute.xlu0 %1670
      %1672 = vrot.lane.b32.xlu0 %v1450, 90
      %v1673 = vpop.permute.xlu0 %1672
      %1674 = vrot.lane.b32.xlu0 %v1451, 90
      %v1675 = vpop.permute.xlu0 %1674
      %1676 = vrot.lane.b32.xlu0 %v1452, 90
      %v1677 = vpop.permute.xlu0 %1676
      %1678 = vrot.lane.b32.xlu0 %v1454, 90
      %v1679 = vpop.permute.xlu0 %1678
      %1680 = vrot.lane.b32.xlu0 %v1455, 90
      %v1681 = vpop.permute.xlu0 %1680
      %1682 = vrot.lane.b32.xlu0 %v1456, 90
      %v1683 = vpop.permute.xlu0 %1682
      %1684 = vrot.lane.b32.xlu0 %v1457, 90
      %v1685 = vpop.permute.xlu0 %1684
      %1686 = vrot.lane.b32.xlu0 %v1458, 90
      %v1687 = vpop.permute.xlu0 %1686
      %vm1688 = vcmask 736256
      %v1689 = vsel %vm1688, %v1669, %v1671
      %v1690 = vsel %vm1688, %v1671, %v1673
      %v1691 = vsel %vm1688, %v1673, %v1675
      %v1692 = vsel %vm1688, %v1675, %v1677
      %v1693 = vsel %vm1688, %v1679, %v1681
      %v1694 = vsel %vm1688, %v1681, %v1683
      %v1695 = vsel %vm1688, %v1683, %v1685
      %v1696 = vsel %vm1688, %v1685, %v1687
      %v1697 = vld [vmem:[%s8] sm:$0xff]
      %v1698 = vld [vmem:[%s8 + $0x8] sm:$0xf]
      %v1699 = vld [vmem:[%s8 + $0xc] sm:$0xff]
      %v1700 = vld [vmem:[%s8 + $0x14] sm:$0xf]
      %v1701 = vld [vmem:[%s8 + $0x18] sm:$0xff]
      %v1702 = vld [vmem:[%s8 + $0x20] sm:$0xf]
      %v1703 = vld [vmem:[%s8 + $0x24] sm:$0xff]
      %v1704 = vld [vmem:[%s8 + $0x2c] sm:$0xf]
      %v1705 = vld [vmem:[%s9] sm:$0xff]
      %v1706 = vld [vmem:[%s9 + $0x8] sm:$0xff]
      %v1707 = vld [vmem:[%s9 + $0x10] sm:$0xff]
      %v1708 = vld [vmem:[%s9 + $0x18] sm:$0xff]
      %1710 = vset.pattern.permute.xlu0 0
      %1711 = vperm.xlu0 %1710, %v1705
      %v1712 = vpop.permute.xlu0 %1711
      %1715 = vset.pattern.permute.xlu0 0
      %1716 = vperm.xlu0 %1715, %v1706
      %v1717 = vpop.permute.xlu0 %1716
      %1720 = vset.pattern.permute.xlu0 0
      %1721 = vperm.xlu0 %1720, %v1707
      %v1722 = vpop.permute.xlu0 %1721
      %1725 = vset.pattern.permute.xlu0 0
      %1726 = vperm.xlu0 %1725, %v1708
      %v1727 = vpop.permute.xlu0 %1726
      %v1737 = vunpack.c.l.b16 %v1697
      %v1738 = vunpack.c.h.b16 %v1697
      %v1739 = vunpack.c.l.b16 %v1698
      %v1740 = vunpack.c.l.b16 %v1699
      %v1741 = vunpack.c.h.b16 %v1699
      %v1742 = vunpack.c.l.b16 %v1700
      %v1743 = vunpack.c.l.b16 %v1701
      %v1744 = vunpack.c.h.b16 %v1701
      %v1745 = vunpack.c.l.b16 %v1702
      %v1746 = vunpack.c.l.b16 %v1703
      %v1747 = vunpack.c.h.b16 %v1703
      %v1748 = vunpack.c.l.b16 %v1704
      %v1749 = vpack.c.b16 %v1740, %v1737
      %v1750 = vpack.c.b16 %v1741, %v1738
      %v1751 = vpack.c.b16 %v1742, %v1739
      %v1752 = vpack.c.b16 %v1746, %v1743
      %v1753 = vpack.c.b16 %v1747, %v1744
      %v1754 = vpack.c.b16 %v1748, %v1745
      %1759 = vrot.lane.b32.xlu0 %v1447, 19
      %v1760 = vpop.permute.xlu0 %1759
      %1761 = vrot.lane.b32.xlu0 %v1448, 19
      %v1762 = vpop.permute.xlu0 %1761
      %1763 = vrot.lane.b32.xlu0 %v1449, 19
      %v1764 = vpop.permute.xlu0 %1763
      %1765 = vrot.lane.b32.xlu0 %v1450, 19
      %v1766 = vpop.permute.xlu0 %1765
      %1767 = vrot.lane.b32.xlu0 %v1451, 19
      %v1768 = vpop.permute.xlu0 %1767
      %1769 = vrot.lane.b32.xlu0 %v1453, 19
      %v1770 = vpop.permute.xlu0 %1769
      %1771 = vrot.lane.b32.xlu0 %v1454, 19
      %v1772 = vpop.permute.xlu0 %1771
      %1773 = vrot.lane.b32.xlu0 %v1455, 19
      %v1774 = vpop.permute.xlu0 %1773
      %1775 = vrot.lane.b32.xlu0 %v1456, 19
      %v1776 = vpop.permute.xlu0 %1775
      %1777 = vrot.lane.b32.xlu0 %v1457, 19
      %v1778 = vpop.permute.xlu0 %1777
      %1779 = vrot.lane.b32.xlu0 %v1490, 19
      %v1780 = vpop.permute.xlu0 %1779
      %1781 = vrot.lane.b32.xlu0 %v1491, 19
      %v1782 = vpop.permute.xlu0 %1781
      %1783 = vrot.lane.b32.xlu0 %v1492, 19
      %v1784 = vpop.permute.xlu0 %1783
      %1785 = vrot.lane.b32.xlu0 %v1493, 19
      %v1786 = vpop.permute.xlu0 %1785
      %1787 = vrot.lane.b32.xlu0 %v1478, 19
      %v1788 = vpop.permute.xlu0 %1787
      %1789 = vrot.lane.b32.xlu0 %v1494, 19
      %v1790 = vpop.permute.xlu0 %1789
      %1791 = vrot.lane.b32.xlu0 %v1495, 19
      %v1792 = vpop.permute.xlu0 %1791
      %1793 = vrot.lane.b32.xlu0 %v1496, 19
      %v1794 = vpop.permute.xlu0 %1793
      %1795 = vrot.lane.b32.xlu0 %v1497, 19
      %v1796 = vpop.permute.xlu0 %1795
      %1797 = vrot.lane.b32.xlu0 %v1488, 19
      %v1798 = vpop.permute.xlu0 %1797
      %1799 = vrot.lane.b32.xlu0 %v1519, 19
      %v1800 = vpop.permute.xlu0 %1799
      %1801 = vrot.lane.b32.xlu0 %v1520, 19
      %v1802 = vpop.permute.xlu0 %1801
      %1803 = vrot.lane.b32.xlu0 %v1521, 19
      %v1804 = vpop.permute.xlu0 %1803
      %1805 = vrot.lane.b32.xlu0 %v1522, 19
      %v1806 = vpop.permute.xlu0 %1805
      %1807 = vrot.lane.b32.xlu0 %v1507, 19
      %v1808 = vpop.permute.xlu0 %1807
      %1809 = vrot.lane.b32.xlu0 %v1523, 19
      %v1810 = vpop.permute.xlu0 %1809
      %1811 = vrot.lane.b32.xlu0 %v1524, 19
      %v1812 = vpop.permute.xlu0 %1811
      %1813 = vrot.lane.b32.xlu0 %v1525, 19
      %v1814 = vpop.permute.xlu0 %1813
      %1815 = vrot.lane.b32.xlu0 %v1526, 19
      %v1816 = vpop.permute.xlu0 %1815
      %1817 = vrot.lane.b32.xlu0 %v1517, 19
      %v1818 = vpop.permute.xlu0 %1817
      %1819 = vrot.lane.b32.xlu0 %v1548, 19
      %v1820 = vpop.permute.xlu0 %1819
      %1821 = vrot.lane.b32.xlu0 %v1549, 19
      %v1822 = vpop.permute.xlu0 %1821
      %1823 = vrot.lane.b32.xlu0 %v1550, 19
      %v1824 = vpop.permute.xlu0 %1823
      %1825 = vrot.lane.b32.xlu0 %v1551, 19
      %v1826 = vpop.permute.xlu0 %1825
      %1827 = vrot.lane.b32.xlu0 %v1536, 19
      %v1828 = vpop.permute.xlu0 %1827
      %1829 = vrot.lane.b32.xlu0 %v1552, 19
      %v1830 = vpop.permute.xlu0 %1829
      %1831 = vrot.lane.b32.xlu0 %v1553, 19
      %v1832 = vpop.permute.xlu0 %1831
      %1833 = vrot.lane.b32.xlu0 %v1554, 19
      %v1834 = vpop.permute.xlu0 %1833
      %1835 = vrot.lane.b32.xlu0 %v1555, 19
      %v1836 = vpop.permute.xlu0 %1835
      %1837 = vrot.lane.b32.xlu0 %v1546, 19
      %v1838 = vpop.permute.xlu0 %1837
      %1839 = vrot.lane.b32.xlu0 %v1557, 19
      %v1840 = vpop.permute.xlu0 %1839
      %1841 = vrot.lane.b32.xlu0 %v1573, 19
      %v1842 = vpop.permute.xlu0 %1841
      %1843 = vrot.lane.b32.xlu0 %v1574, 19
      %v1844 = vpop.permute.xlu0 %1843
      %1845 = vrot.lane.b32.xlu0 %v1575, 19
      %v1846 = vpop.permute.xlu0 %1845
      %1847 = vrot.lane.b32.xlu0 %v1563, 19
      %v1848 = vpop.permute.xlu0 %1847
      %1849 = vrot.lane.b32.xlu0 %v1565, 19
      %v1850 = vpop.permute.xlu0 %1849
      %1851 = vrot.lane.b32.xlu0 %v1576, 19
      %v1852 = vpop.permute.xlu0 %1851
      %1853 = vrot.lane.b32.xlu0 %v1577, 19
      %v1854 = vpop.permute.xlu0 %1853
      %1855 = vrot.lane.b32.xlu0 %v1578, 19
      %v1856 = vpop.permute.xlu0 %1855
      %1857 = vrot.lane.b32.xlu0 %v1571, 19
      %v1858 = vpop.permute.xlu0 %1857
      %1859 = vrot.lane.b32.xlu0 %v1582, 19
      %v1860 = vpop.permute.xlu0 %1859
      %1861 = vrot.lane.b32.xlu0 %v1602, 19
      %v1862 = vpop.permute.xlu0 %1861
      %1863 = vrot.lane.b32.xlu0 %v1603, 19
      %v1864 = vpop.permute.xlu0 %1863
      %1865 = vrot.lane.b32.xlu0 %v1604, 19
      %v1866 = vpop.permute.xlu0 %1865
      %1867 = vrot.lane.b32.xlu0 %v1605, 19
      %v1868 = vpop.permute.xlu0 %1867
      %1869 = vrot.lane.b32.xlu0 %v1592, 19
      %v1870 = vpop.permute.xlu0 %1869
      %1871 = vrot.lane.b32.xlu0 %v1606, 19
      %v1872 = vpop.permute.xlu0 %1871
      %1873 = vrot.lane.b32.xlu0 %v1607, 19
      %v1874 = vpop.permute.xlu0 %1873
      %1875 = vrot.lane.b32.xlu0 %v1608, 19
      %v1876 = vpop.permute.xlu0 %1875
      %1877 = vrot.lane.b32.xlu0 %v1609, 19
      %v1878 = vpop.permute.xlu0 %1877
      %1879 = vrot.lane.b32.xlu0 %v1611, 19
      %v1880 = vpop.permute.xlu0 %1879
      %1881 = vrot.lane.b32.xlu0 %v1631, 19
      %v1882 = vpop.permute.xlu0 %1881
      %1883 = vrot.lane.b32.xlu0 %v1632, 19
      %v1884 = vpop.permute.xlu0 %1883
      %1885 = vrot.lane.b32.xlu0 %v1633, 19
      %v1886 = vpop.permute.xlu0 %1885
      %1887 = vrot.lane.b32.xlu0 %v1634, 19
      %v1888 = vpop.permute.xlu0 %1887
      %1889 = vrot.lane.b32.xlu0 %v1621, 19
      %v1890 = vpop.permute.xlu0 %1889
      %1891 = vrot.lane.b32.xlu0 %v1635, 19
      %v1892 = vpop.permute.xlu0 %1891
      %1893 = vrot.lane.b32.xlu0 %v1636, 19
      %v1894 = vpop.permute.xlu0 %1893
      %1895 = vrot.lane.b32.xlu0 %v1637, 19
      %v1896 = vpop.permute.xlu0 %1895
      %1897 = vrot.lane.b32.xlu0 %v1638, 19
      %v1898 = vpop.permute.xlu0 %1897
      %1899 = vrot.lane.b32.xlu0 %v1640, 19
      %v1900 = vpop.permute.xlu0 %1899
      %1901 = vrot.lane.b32.xlu0 %v1660, 19
      %v1902 = vpop.permute.xlu0 %1901
      %1903 = vrot.lane.b32.xlu0 %v1661, 19
      %v1904 = vpop.permute.xlu0 %1903
      %1905 = vrot.lane.b32.xlu0 %v1662, 19
      %v1906 = vpop.permute.xlu0 %1905
      %1907 = vrot.lane.b32.xlu0 %v1663, 19
      %v1908 = vpop.permute.xlu0 %1907
      %1909 = vrot.lane.b32.xlu0 %v1650, 19
      %v1910 = vpop.permute.xlu0 %1909
      %1911 = vrot.lane.b32.xlu0 %v1664, 19
      %v1912 = vpop.permute.xlu0 %1911
      %1913 = vrot.lane.b32.xlu0 %v1665, 19
      %v1914 = vpop.permute.xlu0 %1913
      %1915 = vrot.lane.b32.xlu0 %v1666, 19
      %v1916 = vpop.permute.xlu0 %1915
      %1917 = vrot.lane.b32.xlu0 %v1667, 19
      %v1918 = vpop.permute.xlu0 %1917
      %1919 = vrot.lane.b32.xlu0 %v1669, 19
      %v1920 = vpop.permute.xlu0 %1919
      %1921 = vrot.lane.b32.xlu0 %v1689, 19
      %v1922 = vpop.permute.xlu0 %1921
      %1923 = vrot.lane.b32.xlu0 %v1690, 19
      %v1924 = vpop.permute.xlu0 %1923
      %1925 = vrot.lane.b32.xlu0 %v1691, 19
      %v1926 = vpop.permute.xlu0 %1925
      %1927 = vrot.lane.b32.xlu0 %v1692, 19
      %v1928 = vpop.permute.xlu0 %1927
      %1929 = vrot.lane.b32.xlu0 %v1679, 19
      %v1930 = vpop.permute.xlu0 %1929
      %1931 = vrot.lane.b32.xlu0 %v1693, 19
      %v1932 = vpop.permute.xlu0 %1931
      %1933 = vrot.lane.b32.xlu0 %v1694, 19
      %v1934 = vpop.permute.xlu0 %1933
      %1935 = vrot.lane.b32.xlu0 %v1695, 19
      %v1936 = vpop.permute.xlu0 %1935
      %1937 = vrot.lane.b32.xlu0 %v1696, 19
      %v1938 = vpop.permute.xlu0 %1937
      %v1939 = vsel %vm1135, %v1760, %v1762
      %v1940 = vsel %vm1135, %v1762, %v1764
      %v1941 = vsel %vm1135, %v1764, %v1766
      %v1942 = vsel %vm1135, %v1766, %v1768
      %v1943 = vsel %vm1135, %v1770, %v1772
      %v1944 = vsel %vm1135, %v1772, %v1774
      %v1945 = vsel %vm1135, %v1774, %v1776
      %v1946 = vsel %vm1135, %v1776, %v1778
      %v1947 = vsel %vm1135, %v1780, %v1782
      %v1948 = vsel %vm1135, %v1782, %v1784
      %v1949 = vsel %vm1135, %v1784, %v1786
      %v1950 = vsel %vm1135, %v1786, %v1788
      %v1951 = vsel %vm1135, %v1790, %v1792
      %v1952 = vsel %vm1135, %v1792, %v1794
      %v1953 = vsel %vm1135, %v1794, %v1796
      %v1954 = vsel %vm1135, %v1796, %v1798
      %v1955 = vsel %vm1135, %v1800, %v1802
      %v1956 = vsel %vm1135, %v1802, %v1804
      %v1957 = vsel %vm1135, %v1804, %v1806
      %v1958 = vsel %vm1135, %v1806, %v1808
      %v1959 = vsel %vm1135, %v1810, %v1812
      %v1960 = vsel %vm1135, %v1812, %v1814
      %v1961 = vsel %vm1135, %v1814, %v1816
      %v1962 = vsel %vm1135, %v1816, %v1818
      %v1963 = vsel %vm1135, %v1820, %v1822
      %v1964 = vsel %vm1135, %v1822, %v1824
      %v1965 = vsel %vm1135, %v1824, %v1826
      %v1966 = vsel %vm1135, %v1826, %v1828
      %v1967 = vsel %vm1135, %v1830, %v1832
      %v1968 = vsel %vm1135, %v1832, %v1834
      %v1969 = vsel %vm1135, %v1834, %v1836
      %v1970 = vsel %vm1135, %v1836, %v1838
      %v1971 = vsel %vm1135, %v1840, %v1842
      %v1972 = vsel %vm1135, %v1842, %v1844
      %v1973 = vsel %vm1135, %v1844, %v1846
      %v1974 = vsel %vm1135, %v1846, %v1848
      %v1975 = vsel %vm1135, %v1850, %v1852
      %v1976 = vsel %vm1135, %v1852, %v1854
      %v1977 = vsel %vm1135, %v1854, %v1856
      %v1978 = vsel %vm1135, %v1856, %v1858
      %v1979 = vsel %vm1135, %v1860, %v1862
      %v1980 = vsel %vm1135, %v1862, %v1864
      %v1981 = vsel %vm1135, %v1864, %v1866
      %v1982 = vsel %vm1135, %v1866, %v1868
      %v1983 = vsel %vm1135, %v1870, %v1872
      %v1984 = vsel %vm1135, %v1872, %v1874
      %v1985 = vsel %vm1135, %v1874, %v1876
      %v1986 = vsel %vm1135, %v1876, %v1878
      %v1987 = vsel %vm1135, %v1880, %v1882
      %v1988 = vsel %vm1135, %v1882, %v1884
      %v1989 = vsel %vm1135, %v1884, %v1886
      %v1990 = vsel %vm1135, %v1886, %v1888
      %v1991 = vsel %vm1135, %v1890, %v1892
      %v1992 = vsel %vm1135, %v1892, %v1894
      %v1993 = vsel %vm1135, %v1894, %v1896
      %v1994 = vsel %vm1135, %v1896, %v1898
      %v1995 = vsel %vm1135, %v1900, %v1902
      %v1996 = vsel %vm1135, %v1902, %v1904
      %v1997 = vsel %vm1135, %v1904, %v1906
      %v1998 = vsel %vm1135, %v1906, %v1908
      %v1999 = vsel %vm1135, %v1910, %v1912
      %v2000 = vsel %vm1135, %v1912, %v1914
      %v2001 = vsel %vm1135, %v1914, %v1916
      %v2002 = vsel %vm1135, %v1916, %v1918
      %v2003 = vsel %vm1135, %v1920, %v1922
      %v2004 = vsel %vm1135, %v1922, %v1924
      %v2005 = vsel %vm1135, %v1924, %v1926
      %v2006 = vsel %vm1135, %v1926, %v1928
      %v2007 = vsel %vm1135, %v1930, %v1932
      %v2008 = vsel %vm1135, %v1932, %v1934
      %v2009 = vsel %vm1135, %v1934, %v1936
      %v2010 = vsel %vm1135, %v1936, %v1938
      %vm2083 = vcmask 261120
      %v2085 = vsel %vm2083, %v1751, 0
      %v2088 = vsel %vm2083, %v1754, 0
      %2090 = vmatprep.subr.bf16.mxu0 %v1968
      %2091 = vmatpush1.bf16.msra.mxu0 %v1967
      %2092 = vmatprep.subr.bf16.mxu0 %v1964
      %2093 = vmatpush1.bf16.msra.mxu0 %v1963
      %2094 = vmatprep.subr.bf16.mxu0 %v1960
      %2095 = vmatpush1.bf16.msra.mxu0 %v1959
      %2096 = vmatprep.subr.bf16.mxu0 %v1956
      %2097 = vmatpush1.bf16.msra.mxu0 %v1955
      %2098 = vmatprep.subr.bf16.mxu0 %v1952
      %2099 = vmatpush1.bf16.msra.mxu0 %v1951
      %2100 = vmatprep.subr.bf16.mxu0 %v1948
      %2101 = vmatpush1.bf16.msra.mxu0 %v1947
      %2102 = vmatprep.subr.bf16.mxu0 %v1944
      %2103 = vmatpush1.bf16.msra.mxu0 %v1943
      %2104 = vmatprep.subr.bf16.mxu0 %v1940
      %2105 = vmatpush1.bf16.msra.mxu0 %v1939
      %2106 = vmatprep.subr.bf16.mxu0 %v2000
      %2107 = vmatpush2.bf16.msra.mxu0 %v1999
      %2108 = vmatprep.subr.bf16.mxu0 %v1996
      %2109 = vmatpush2.bf16.msra.mxu0 %v1995
      %2110 = vmatprep.subr.bf16.mxu0 %v1992
      %2111 = vmatpush2.bf16.msra.mxu0 %v1991
      %2112 = vmatprep.subr.bf16.mxu0 %v1988
      %2113 = vmatpush2.bf16.msra.mxu0 %v1987
      %2114 = vmatprep.subr.bf16.mxu0 %v1984
      %2115 = vmatpush2.bf16.msra.mxu0 %v1983
      %2116 = vmatprep.subr.bf16.mxu0 %v1980
      %2117 = vmatpush2.bf16.msra.mxu0 %v1979
      %2118 = vmatprep.subr.bf16.mxu0 %v1976
      %2119 = vmatpush2.bf16.msra.mxu0 %v1975
      %2120 = vmatprep.subr.bf16.mxu0 %v1972
      %2121 = vmatpush2.bf16.msra.mxu0 %v1971
      %2122 = vmatprep.mubr.bf16.mxu0 %v1750
      %2123 = vmatmul.mubr.bf16.gmra.mxu0 %v1749
      %v2124 = vpop.f32.mrf.mxu0
      %v2125 = vadd.f32 %v1712, %v2124
      %v2126 = vpop.f32.mrf.mxu0
      %v2127 = vadd.f32 %v1712, %v2126
      %v2128 = vpop.f32.mrf.mxu0
      %v2129 = vadd.f32 %v1717, %v2128
      %v2130 = vpop.f32.mrf.mxu0
      %v2131 = vadd.f32 %v1717, %v2130
      %2132 = vmatprep.mubr.bf16.mxu0 %v1753
      %2133 = vmatmul.mubr.bf16.gmra.mxu0 %v1752
      %v2134 = vpop.f32.mrf.mxu0
      %v2135 = vadd.f32 %v1722, %v2134
      %v2136 = vpop.f32.mrf.mxu0
      %v2137 = vadd.f32 %v1722, %v2136
      %v2138 = vpop.f32.mrf.mxu0
      %v2139 = vadd.f32 %v1727, %v2138
      %v2140 = vpop.f32.mrf.mxu0
      %v2141 = vadd.f32 %v1727, %v2140
      %2142 = vdwg.mxu0
      %2143 = vmatprep.subr.bf16.mxu0 0
      %2144 = vmatpush1.bf16.msra.mxu0 0
      %2145 = vmatprep.subr.bf16.mxu0 0
      %2146 = vmatpush1.bf16.msra.mxu0 0
      %2147 = vmatprep.subr.bf16.mxu0 0
      %2148 = vmatpush1.bf16.msra.mxu0 0
      %2149 = vmatprep.subr.bf16.mxu0 0
      %2150 = vmatpush1.bf16.msra.mxu0 0
      %2151 = vmatprep.subr.bf16.mxu0 0
      %2152 = vmatpush1.bf16.msra.mxu0 0
      %2153 = vmatprep.subr.bf16.mxu0 0
      %2154 = vmatpush1.bf16.msra.mxu0 0
      %2155 = vmatprep.subr.bf16.mxu0 %v2008
      %2156 = vmatpush1.bf16.msra.mxu0 %v2007
      %2157 = vmatprep.subr.bf16.mxu0 %v2004
      %2158 = vmatpush1.bf16.msra.mxu0 %v2003
      %2159 = vmatprep.subr.bf16.mxu0 0
      %2160 = vmatpush2.bf16.msra.mxu0 0
      %2161 = vmatprep.subr.bf16.mxu0 0
      %2162 = vmatpush2.bf16.msra.mxu0 0
      %2163 = vmatprep.subr.bf16.mxu0 0
      %2164 = vmatpush2.bf16.msra.mxu0 0
      %2165 = vmatprep.subr.bf16.mxu0 0
      %2166 = vmatpush2.bf16.msra.mxu0 0
      %2167 = vmatprep.subr.bf16.mxu0 0
      %2168 = vmatpush2.bf16.msra.mxu0 0
      %2169 = vmatprep.subr.bf16.mxu0 0
      %2170 = vmatpush2.bf16.msra.mxu0 0
      %2171 = vmatprep.subr.bf16.mxu0 0
      %2172 = vmatpush2.bf16.msra.mxu0 0
      %2173 = vmatprep.subr.bf16.mxu0 0
      %2174 = vmatpush2.bf16.msra.mxu0 0
      %2175 = vmatprep.mubr.bf16.mxu0 0
      %2176 = vmatmul.mubr.bf16.gmra.mxu0 %v2085
      %v2177 = vpop.f32.mrf.mxu0
      %v2178 = vadd.f32 %v2125, %v2177
      %v2179 = vpop.f32.mrf.mxu0
      %v2180 = vadd.f32 %v2127, %v2179
      %v2181 = vpop.f32.mrf.mxu0
      %v2182 = vadd.f32 %v2129, %v2181
      %v2183 = vpop.f32.mrf.mxu0
      %v2184 = vadd.f32 %v2131, %v2183
      %2185 = vmatprep.mubr.bf16.mxu0 0
      %2186 = vmatmul.mubr.bf16.gmra.mxu0 %v2088
      %v2187 = vpop.f32.mrf.mxu0
      %v2188 = vadd.f32 %v2135, %v2187
      %v2189 = vpop.f32.mrf.mxu0
      %v2190 = vadd.f32 %v2137, %v2189
      %v2191 = vpop.f32.mrf.mxu0
      %v2192 = vadd.f32 %v2139, %v2191
      %v2193 = vpop.f32.mrf.mxu0
      %v2194 = vadd.f32 %v2141, %v2193
      %2195 = vdwg.mxu0
      %2196 = vmatprep.subr.bf16.mxu0 %v1970
      %2197 = vmatpush1.bf16.msra.mxu0 %v1969
      %2198 = vmatprep.subr.bf16.mxu0 %v1966
      %2199 = vmatpush1.bf16.msra.mxu0 %v1965
      %2200 = vmatprep.subr.bf16.mxu0 %v1962
      %2201 = vmatpush1.bf16.msra.mxu0 %v1961
      %2202 = vmatprep.subr.bf16.mxu0 %v1958
      %2203 = vmatpush1.bf16.msra.mxu0 %v1957
      %2204 = vmatprep.subr.bf16.mxu0 %v1954
      %2205 = vmatpush1.bf16.msra.mxu0 %v1953
      %2206 = vmatprep.subr.bf16.mxu0 %v1950
      %2207 = vmatpush1.bf16.msra.mxu0 %v1949
      %2208 = vmatprep.subr.bf16.mxu0 %v1946
      %2209 = vmatpush1.bf16.msra.mxu0 %v1945
      %2210 = vmatprep.subr.bf16.mxu0 %v1942
      %2211 = vmatpush1.bf16.msra.mxu0 %v1941
      %2212 = vmatprep.subr.bf16.mxu0 %v2002
      %2213 = vmatpush2.bf16.msra.mxu0 %v2001
      %2214 = vmatprep.subr.bf16.mxu0 %v1998
      %2215 = vmatpush2.bf16.msra.mxu0 %v1997
      %2216 = vmatprep.subr.bf16.mxu0 %v1994
      %2217 = vmatpush2.bf16.msra.mxu0 %v1993
      %2218 = vmatprep.subr.bf16.mxu0 %v1990
      %2219 = vmatpush2.bf16.msra.mxu0 %v1989
      %2220 = vmatprep.subr.bf16.mxu0 %v1986
      %2221 = vmatpush2.bf16.msra.mxu0 %v1985
      %2222 = vmatprep.subr.bf16.mxu0 %v1982
      %2223 = vmatpush2.bf16.msra.mxu0 %v1981
      %2224 = vmatprep.subr.bf16.mxu0 %v1978
      %2225 = vmatpush2.bf16.msra.mxu0 %v1977
      %2226 = vmatprep.subr.bf16.mxu0 %v1974
      %2227 = vmatpush2.bf16.msra.mxu0 %v1973
      %2228 = vmatprep.mubr.bf16.mxu0 %v1750
      %2229 = vmatmul.mubr.bf16.gmra.mxu0 %v1749
      %v2230 = vpop.f32.mrf.mxu0
      %v2231 = vadd.f32 %v1712, %v2230
      %v2232 = vpop.f32.mrf.mxu0
      %v2233 = vadd.f32 %v1712, %v2232
      %v2234 = vpop.f32.mrf.mxu0
      %v2235 = vadd.f32 %v1717, %v2234
      %v2236 = vpop.f32.mrf.mxu0
      %v2237 = vadd.f32 %v1717, %v2236
      %2238 = vmatprep.mubr.bf16.mxu0 %v1753
      %2239 = vmatmul.mubr.bf16.gmra.mxu0 %v1752
      %v2240 = vpop.f32.mrf.mxu0
      %v2241 = vadd.f32 %v1722, %v2240
      %v2242 = vpop.f32.mrf.mxu0
      %v2243 = vadd.f32 %v1722, %v2242
      %v2244 = vpop.f32.mrf.mxu0
      %v2245 = vadd.f32 %v1727, %v2244
      %v2246 = vpop.f32.mrf.mxu0
      %v2247 = vadd.f32 %v1727, %v2246
      %2248 = vdwg.mxu0
      %2249 = vmatprep.subr.bf16.mxu0 0
      %2250 = vmatpush1.bf16.msra.mxu0 0
      %2251 = vmatprep.subr.bf16.mxu0 0
      %2252 = vmatpush1.bf16.msra.mxu0 0
      %2253 = vmatprep.subr.bf16.mxu0 0
      %2254 = vmatpush1.bf16.msra.mxu0 0
      %2255 = vmatprep.subr.bf16.mxu0 0
      %2256 = vmatpush1.bf16.msra.mxu0 0
      %2257 = vmatprep.subr.bf16.mxu0 0
      %2258 = vmatpush1.bf16.msra.mxu0 0
      %2259 = vmatprep.subr.bf16.mxu0 0
      %2260 = vmatpush1.bf16.msra.mxu0 0
      %2261 = vmatprep.subr.bf16.mxu0 %v2010
      %2262 = vmatpush1.bf16.msra.mxu0 %v2009
      %2263 = vmatprep.subr.bf16.mxu0 %v2006
      %2264 = vmatpush1.bf16.msra.mxu0 %v2005
      %2265 = vmatprep.subr.bf16.mxu0 0
      %2266 = vmatpush2.bf16.msra.mxu0 0
      %2267 = vmatprep.subr.bf16.mxu0 0
      %2268 = vmatpush2.bf16.msra.mxu0 0
      %2269 = vmatprep.subr.bf16.mxu0 0
      %2270 = vmatpush2.bf16.msra.mxu0 0
      %2271 = vmatprep.subr.bf16.mxu0 0
      %2272 = vmatpush2.bf16.msra.mxu0 0
      %2273 = vmatprep.subr.bf16.mxu0 0
      %2274 = vmatpush2.bf16.msra.mxu0 0
      %2275 = vmatprep.subr.bf16.mxu0 0
      %2276 = vmatpush2.bf16.msra.mxu0 0
      %2277 = vmatprep.subr.bf16.mxu0 0
      %2278 = vmatpush2.bf16.msra.mxu0 0
      %2279 = vmatprep.subr.bf16.mxu0 0
      %2280 = vmatpush2.bf16.msra.mxu0 0
      %2281 = vmatprep.mubr.bf16.mxu0 0
      %2282 = vmatmul.mubr.bf16.gmra.mxu0 %v2085
      %v2283 = vpop.f32.mrf.mxu0
      %v2284 = vadd.f32 %v2231, %v2283
      %v2285 = vpop.f32.mrf.mxu0
      %v2286 = vadd.f32 %v2233, %v2285
      %v2287 = vpop.f32.mrf.mxu0
      %v2288 = vadd.f32 %v2235, %v2287
      %v2289 = vpop.f32.mrf.mxu0
      %v2290 = vadd.f32 %v2237, %v2289
      %2291 = vmatprep.mubr.bf16.mxu0 0
      %2292 = vmatmul.mubr.bf16.gmra.mxu0 %v2088
      %v2293 = vpop.f32.mrf.mxu0
      %v2294 = vadd.f32 %v2241, %v2293
      %v2295 = vpop.f32.mrf.mxu0
      %v2296 = vadd.f32 %v2243, %v2295
      %v2297 = vpop.f32.mrf.mxu0
      %v2298 = vadd.f32 %v2245, %v2297
      %v2299 = vpop.f32.mrf.mxu0
      %v2300 = vadd.f32 %v2247, %v2299
      %2301 = vdwg.mxu0
      %v2302 = vmax.f32 %v2178, 0.0
      %v2303 = vmax.f32 %v2180, 0.0
      %v2304 = vmax.f32 %v2284, 0.0
      %v2305 = vmax.f32 %v2286, 0.0
      %v2306 = vmax.f32 %v2182, 0.0
      %v2307 = vmax.f32 %v2184, 0.0
      %v2308 = vmax.f32 %v2288, 0.0
      %v2309 = vmax.f32 %v2290, 0.0
      %v2310 = vmax.f32 %v2188, 0.0
      %v2311 = vmax.f32 %v2190, 0.0
      %v2312 = vmax.f32 %v2294, 0.0
      %v2313 = vmax.f32 %v2296, 0.0
      %v2314 = vmax.f32 %v2192, 0.0
      %v2315 = vmax.f32 %v2194, 0.0
      %v2316 = vmax.f32 %v2298, 0.0
      %v2317 = vmax.f32 %v2300, 0.0
      %v2318 = vmax.f32 %v2302, 1e-06
      %v2319 = vmax.f32 %v2303, 1e-06
      %v2320 = vmax.f32 %v2304, 1e-06
      %v2321 = vmax.f32 %v2305, 1e-06
      %v2322 = vmax.f32 %v2306, 1e-06
      %v2323 = vmax.f32 %v2307, 1e-06
      %v2324 = vmax.f32 %v2308, 1e-06
      %v2325 = vmax.f32 %v2309, 1e-06
      %v2326 = vmax.f32 %v2310, 1e-06
      %v2327 = vmax.f32 %v2311, 1e-06
      %v2328 = vmax.f32 %v2312, 1e-06
      %v2329 = vmax.f32 %v2313, 1e-06
      %v2330 = vmax.f32 %v2314, 1e-06
      %v2331 = vmax.f32 %v2315, 1e-06
      %v2332 = vmax.f32 %v2316, 1e-06
      %v2333 = vmax.f32 %v2317, 1e-06
      %v2334 = vmul.f32 %v2318, %v2318
      %v2335 = vmul.f32 %v2319, %v2319
      %v2336 = vmul.f32 %v2320, %v2320
      %v2337 = vmul.f32 %v2321, %v2321
      %v2338 = vmul.f32 %v2322, %v2322
      %v2339 = vmul.f32 %v2323, %v2323
      %v2340 = vmul.f32 %v2324, %v2324
      %v2341 = vmul.f32 %v2325, %v2325
      %v2342 = vmul.f32 %v2326, %v2326
      %v2343 = vmul.f32 %v2327, %v2327
      %v2344 = vmul.f32 %v2328, %v2328
      %v2345 = vmul.f32 %v2329, %v2329
      %v2346 = vmul.f32 %v2330, %v2330
      %v2347 = vmul.f32 %v2331, %v2331
      %v2348 = vmul.f32 %v2332, %v2332
      %v2349 = vmul.f32 %v2333, %v2333
      %v2350 = vmul.f32 %v2334, %v2318
      %v2351 = vmul.f32 %v2335, %v2319
      %v2352 = vmul.f32 %v2336, %v2320
      %v2353 = vmul.f32 %v2337, %v2321
      %v2354 = vmul.f32 %v2338, %v2322
      %v2355 = vmul.f32 %v2339, %v2323
      %v2356 = vmul.f32 %v2340, %v2324
      %v2357 = vmul.f32 %v2341, %v2325
      %v2358 = vmul.f32 %v2342, %v2326
      %v2359 = vmul.f32 %v2343, %v2327
      %v2360 = vmul.f32 %v2344, %v2328
      %v2361 = vmul.f32 %v2345, %v2329
      %v2362 = vmul.f32 %v2346, %v2330
      %v2363 = vmul.f32 %v2347, %v2331
      %v2364 = vmul.f32 %v2348, %v2332
      %v2365 = vmul.f32 %v2349, %v2333
      %v2366 = vmul.f32 %v2350, %v1406
      %v2367 = vmul.f32 %v2351, %v1410
      %v2368 = vmul.f32 %v2352, %v1414
      %v2369 = vmul.f32 %v2353, %v1418
      %v2370 = vmul.f32 %v2354, %v1406
      %v2371 = vmul.f32 %v2355, %v1410
      %v2372 = vmul.f32 %v2356, %v1414
      %v2373 = vmul.f32 %v2357, %v1418
      %v2374 = vmul.f32 %v2358, %v1406
      %v2375 = vmul.f32 %v2359, %v1410
      %v2376 = vmul.f32 %v2360, %v1414
      %v2377 = vmul.f32 %v2361, %v1418
      %v2378 = vmul.f32 %v2362, %v1406
      %v2379 = vmul.f32 %v2363, %v1410
      %v2380 = vmul.f32 %v2364, %v1414
      %v2381 = vmul.f32 %v2365, %v1418
      %v2382 = vadd.f32 %v2366, %v2367
      %v2383 = vadd.f32 %v2382, %v2368
      %v2384 = vadd.f32 %v2383, %v2369
      %2385 = vadd.xlane.f32.xlu0 %v2384
      %v2386 = vpop.xlane.xlu0 %2385
      %v2387 = vadd.f32 %v2370, %v2371
      %v2388 = vadd.f32 %v2387, %v2372
      %v2389 = vadd.f32 %v2388, %v2373
      %2390 = vadd.xlane.f32.xlu0 %v2389
      %v2391 = vpop.xlane.xlu0 %2390
      %v2392 = vadd.f32 %v2374, %v2375
      %v2393 = vadd.f32 %v2392, %v2376
      %v2394 = vadd.f32 %v2393, %v2377
      %2395 = vadd.xlane.f32.xlu0 %v2394
      %v2396 = vpop.xlane.xlu0 %2395
      %v2397 = vadd.f32 %v2378, %v2379
      %v2398 = vadd.f32 %v2397, %v2380
      %v2399 = vadd.f32 %v2398, %v2381
      %2400 = vadd.xlane.f32.xlu0 %v2399
      %v2401 = vpop.xlane.xlu0 %2400
      %v2402 = vlaneseq
      %v2403 = vand.u32 %v2402, 127
      %v2404 = vstv %s27
      %vm2405 = vcmp.eq.s32.totalorder %v2403, %v2404
      %v2406 = vld [vmem:[#allocation2] sm:$0xff]
      %v2407 = vld [vmem:[#allocation2 + $0x8] sm:$0xff]
      %v2408 = vld [vmem:[#allocation2 + $0x10] sm:$0xff]
      %v2409 = vld [vmem:[#allocation2 + $0x18] sm:$0xff]
      %v2410 = vsel %vm2405, 1, 0
      %v2411 = vcvt.s32.f32 %v2410
      %v2412 = vmul.f32 %v2386, %v2411
      %v2413 = vmul.f32 %v2391, %v2411
      %v2414 = vmul.f32 %v2396, %v2411
      %v2415 = vmul.f32 %v2401, %v2411
      %v2416 = vadd.f32 %v2406, %v2412
      %v2417 = vadd.f32 %v2407, %v2413
      %v2418 = vadd.f32 %v2408, %v2414
      %v2419 = vadd.f32 %v2409, %v2415
      %vm2420 = vcmask 15360
      %2421 = vst.msk [vmem:[#allocation2] sm:$0xff] %vm2420, %v2416
      %2422 = vst.msk [vmem:[#allocation2 + $0x8] sm:$0xff] %vm2420, %v2417
      %2423 = vst.msk [vmem:[#allocation2 + $0x10] sm:$0xff] %vm2420, %v2418
      %2424 = vst.msk [vmem:[#allocation2 + $0x18] sm:$0xff] %vm2420, %v2419
      %p2425 = scmp.eq.s32.totalorder %s27, 1
      %p2426 = pnand %p2425, %p642
      %p2427 = pneg %p2426
      // Predicated region
      $region73: #{_lambda_.1} parent=67 // pred_check
        _
      $region74: #{_lambda_.1} parent=67 // pred_check_branch
        %2429 = sbr.rel (%p2426) target = $region76
      $region75: #{_lambda_.1} parent=67 // pred_region
        %v2430 = vld [vmem:[#allocation2] sm:$0xff]
        %v2431 = vld [vmem:[#allocation2 + $0x8] sm:$0xff]
        %v2432 = vld [vmem:[#allocation2 + $0x10] sm:$0xff]
        %v2433 = vld [vmem:[#allocation2 + $0x18] sm:$0xff]
        %v2434 = vmul.f32 %v2430, 0.00390625
        %v2435 = vmul.f32 %v2431, 0.00390625
        %v2436 = vmul.f32 %v2432, 0.00390625
        %v2437 = vmul.f32 %v2433, 0.00390625
        %v2438 = vlog2.pop %v2434
        %v2439 = vmul.f32 %v2438, 0.6931472
        %v2440 = vlog2.pop %v2435
        %v2441 = vmul.f32 %v2440, 0.6931472
        %v2442 = vlog2.pop %v2436
        %v2443 = vmul.f32 %v2442, 0.6931472
        %v2444 = vlog2.pop %v2437
        %v2445 = vmul.f32 %v2444, 0.6931472
        %v2446 = vmul.f32 %v2439, 0.33333334
        %v2447 = vmul.f32 %v2441, 0.33333334
        %v2448 = vmul.f32 %v2443, 0.33333334
        %v2449 = vmul.f32 %v2445, 0.33333334
        %v2450 = vmul.f32 %v2446, 1.442695
        %v2451 = vpow.pop %v2450
        %v2452 = vmul.f32 %v2447, 1.442695
        %v2453 = vpow.pop %v2452
        %v2454 = vmul.f32 %v2448, 1.442695
        %v2455 = vpow.pop %v2454
        %v2456 = vmul.f32 %v2449, 1.442695
        %v2457 = vpow.pop %v2456
        %v2458 = vmul.f32 %v2451, %v2451
        %v2459 = vmul.f32 %v2453, %v2453
        %v2460 = vmul.f32 %v2455, %v2455
        %v2461 = vmul.f32 %v2457, %v2457
        %v2462 = vsel %vm2420, %v2458, 0.0
        %v2463 = vsel %vm2420, %v2459, 0.0
        %v2464 = vadd.f32 %v2462, %v2463
        %v2465 = vsel %vm2420, %v2460, 0.0
        %v2466 = vadd.f32 %v2464, %v2465
        %v2467 = vsel %vm2420, %v2461, 0.0
        %v2468 = vadd.f32 %v2466, %v2467
        %v2469 = vrot.slane %v2468, 4
        %v2470 = vadd.f32 %v2468, %v2469
        %v2471 = vrot.slane %v2470, 2
        %v2472 = vadd.f32 %v2470, %v2471
        %v2473 = vrot.slane %v2472, 1
        %v2474 = vadd.f32 %v2472, %v2473
        %v2475 = vrsqrt.pop %v2474
        %v2476 = vmul.f32 %v2474, %v2475
        %vm2477 = vcmp.eq.f32.partialorder %v2474, inf
        %v2478 = vsel %vm2477, %v2474, %v2476
        %vm2479 = vcmp.eq.f32.partialorder %v2474, 0.0
        %v2480 = vand.u32 %v2474, 2147483648
        %v2481 = vsel %vm2479, %v2480, %v2478
        %v2482 = vadd.f32 %v2481, 1e-06
        %v2483 = vrcp.pop %v2482
        %v2484 = vmul.f32 %v2451, %v2483
        %v2485 = vmul.f32 %v2453, %v2483
        %v2486 = vmul.f32 %v2455, %v2483
        %v2487 = vmul.f32 %v2457, %v2483
        %v2488 = vld [vmem:[%s10] sm:$0xff]
        %v2489 = vld [vmem:[%s10 + $0x8] sm:$0xff]
        %v2490 = vld [vmem:[%s10 + $0x10] sm:$0xff]
        %v2491 = vld [vmem:[%s10 + $0x18] sm:$0xff]
        %v2492 = vld [vmem:[%s11] sm:$0xff]
        %v2493 = vld [vmem:[%s11 + $0x8] sm:$0xff]
        %v2494 = vld [vmem:[%s11 + $0x10] sm:$0xff]
        %v2495 = vld [vmem:[%s11 + $0x18] sm:$0xff]
        %2497 = vset.pattern.permute.xlu0 0
        %2498 = vperm.xlu0 %2497, %v2492
        %v2499 = vpop.permute.xlu0 %2498
        %2502 = vset.pattern.permute.xlu0 0
        %2503 = vperm.xlu0 %2502, %v2493
        %v2504 = vpop.permute.xlu0 %2503
        %2507 = vset.pattern.permute.xlu0 0
        %2508 = vperm.xlu0 %2507, %v2494
        %v2509 = vpop.permute.xlu0 %2508
        %2512 = vset.pattern.permute.xlu0 0
        %2513 = vperm.xlu0 %2512, %v2495
        %v2514 = vpop.permute.xlu0 %2513
        %v2517 = vsel %vm2083, %v2488, 0
        %v2520 = vsel %vm2083, %v2489, 0
        %v2523 = vsel %vm2083, %v2490, 0
        %v2526 = vsel %vm2083, %v2491, 0
        %2528 = vmatprep.subr.mxu0 0.0
        %2529 = vmatpush1.msra.mxu0 0.0
        %2530 = vmatprep.subr.mxu0 0.0
        %2531 = vmatpush1.msra.mxu0 0.0
        %2532 = vmatprep.subr.mxu0 0.0
        %2533 = vmatpush1.msra.mxu0 0.0
        %2534 = vmatprep.subr.mxu0 0.0
        %2535 = vmatpush1.msra.mxu0 0.0
        %2536 = vmatprep.subr.mxu0 0.0
        %2537 = vmatpush1.msra.mxu0 0.0
        %2538 = vmatprep.subr.mxu0 0.0
        %2539 = vmatpush1.msra.mxu0 0.0
        %2540 = vmatprep.subr.mxu0 0.0
        %2541 = vmatpush1.msra.mxu0 0.0
        %2542 = vmatprep.subr.mxu0 0.0
        %2543 = vmatpush1.msra.mxu0 0.0
        %2544 = vmatprep.subr.mxu0 0.0
        %2545 = vmatpush1.msra.mxu0 0.0
        %2546 = vmatprep.subr.mxu0 0.0
        %2547 = vmatpush1.msra.mxu0 0.0
        %2548 = vmatprep.subr.mxu0 0.0
        %2549 = vmatpush1.msra.mxu0 0.0
        %2550 = vmatprep.subr.mxu0 0.0
        %2551 = vmatpush1.msra.mxu0 0.0
        %2552 = vmatprep.subr.mxu0 0.0
        %2553 = vmatpush1.msra.mxu0 %v2487
        %2554 = vmatprep.subr.mxu0 0.0
        %2555 = vmatpush1.msra.mxu0 %v2486
        %2556 = vmatprep.subr.mxu0 0.0
        %2557 = vmatpush1.msra.mxu0 %v2485
        %2558 = vmatprep.subr.mxu0 0.0
        %2559 = vmatpush1.msra.mxu0 %v2484
        %2560 = vmatprep.subr.mxu0 0.0
        %2561 = vmatpush2.msra.mxu0 0.0
        %2562 = vmatprep.subr.mxu0 0.0
        %2563 = vmatpush2.msra.mxu0 0.0
        %2564 = vmatprep.subr.mxu0 0.0
        %2565 = vmatpush2.msra.mxu0 0.0
        %2566 = vmatprep.subr.mxu0 0.0
        %2567 = vmatpush2.msra.mxu0 0.0
        %2568 = vmatprep.subr.mxu0 0.0
        %2569 = vmatpush2.msra.mxu0 0.0
        %2570 = vmatprep.subr.mxu0 0.0
        %2571 = vmatpush2.msra.mxu0 0.0
        %2572 = vmatprep.subr.mxu0 0.0
        %2573 = vmatpush2.msra.mxu0 0.0
        %2574 = vmatprep.subr.mxu0 0.0
        %2575 = vmatpush2.msra.mxu0 0.0
        %2576 = vmatprep.subr.mxu0 0.0
        %2577 = vmatpush2.msra.mxu0 0.0
        %2578 = vmatprep.subr.mxu0 0.0
        %2579 = vmatpush2.msra.mxu0 0.0
        %2580 = vmatprep.subr.mxu0 0.0
        %2581 = vmatpush2.msra.mxu0 0.0
        %2582 = vmatprep.subr.mxu0 0.0
        %2583 = vmatpush2.msra.mxu0 0.0
        %2584 = vmatprep.subr.mxu0 0.0
        %2585 = vmatpush2.msra.mxu0 0.0
        %2586 = vmatprep.subr.mxu0 0.0
        %2587 = vmatpush2.msra.mxu0 0.0
        %2588 = vmatprep.subr.mxu0 0.0
        %2589 = vmatpush2.msra.mxu0 0.0
        %2590 = vmatprep.subr.mxu0 0.0
        %2591 = vmatpush2.msra.mxu0 0.0
        %2592 = vmatprep.mubr.f32.mxu0 0.0
        %2593 = vmatmul.mubr.f32.gmra.mxu0 %v2517
        %v2594 = vpop.f32.mrf.mxu0
        %v2595 = vadd.f32 %v2499, %v2594
        %v2596 = vpop.f32.mrf.mxu0
        %2597 = vmatprep.mubr.f32.mxu0 0.0
        %2598 = vmatmul.mubr.f32.gmra.mxu0 %v2520
        %v2599 = vpop.f32.mrf.mxu0
        %v2600 = vadd.f32 %v2504, %v2599
        %v2601 = vpop.f32.mrf.mxu0
        %2602 = vmatprep.mubr.f32.mxu0 0.0
        %2603 = vmatmul.mubr.f32.gmra.mxu0 %v2523
        %v2604 = vpop.f32.mrf.mxu0
        %v2605 = vadd.f32 %v2509, %v2604
        %v2606 = vpop.f32.mrf.mxu0
        %2607 = vmatprep.mubr.f32.mxu0 0.0
        %2608 = vmatmul.mubr.f32.gmra.mxu0 %v2526
        %v2609 = vpop.f32.mrf.mxu0
        %v2610 = vadd.f32 %v2514, %v2609
        %v2611 = vpop.f32.mrf.mxu0
        %2612 = vdwg.mxu0
        %v2613 = vmul.f32 %v2595, %v2595
        %v2614 = vmul.f32 %v2600, %v2600
        %v2615 = vmul.f32 %v2605, %v2605
        %v2616 = vmul.f32 %v2610, %v2610
        %v2617 = vsel %vm2420, %v2613, 0.0
        %v2618 = vsel %vm2420, %v2614, 0.0
        %v2619 = vadd.f32 %v2617, %v2618
        %v2620 = vsel %vm2420, %v2615, 0.0
        %v2621 = vadd.f32 %v2619, %v2620
        %v2622 = vsel %vm2420, %v2616, 0.0
        %v2623 = vadd.f32 %v2621, %v2622
        %v2624 = vrot.slane %v2623, 4
        %v2625 = vadd.f32 %v2623, %v2624
        %v2626 = vrot.slane %v2625, 2
        %v2627 = vadd.f32 %v2625, %v2626
        %v2628 = vrot.slane %v2627, 1
        %v2629 = vadd.f32 %v2627, %v2628
        %v2630 = vrsqrt.pop %v2629
        %v2631 = vmul.f32 %v2629, %v2630
        %vm2632 = vcmp.eq.f32.partialorder %v2629, inf
        %v2633 = vsel %vm2632, %v2629, %v2631
        %vm2634 = vcmp.eq.f32.partialorder %v2629, 0.0
        %v2635 = vand.u32 %v2629, 2147483648
        %v2636 = vsel %vm2634, %v2635, %v2633
        %v2637 = vadd.f32 %v2636, 1e-06
        %v2638 = vrcp.pop %v2637
        %v2639 = vmul.f32 %v2595, %v2638
        %v2640 = vmul.f32 %v2600, %v2638
        %v2641 = vmul.f32 %v2605, %v2638
        %v2642 = vmul.f32 %v2610, %v2638
        %2643 = vst.msk [vmem:[%s12] sm:$0xff] %vm2420, %v2639
        %2644 = vst.msk [vmem:[%s12 + $0x8] sm:$0xff] %vm2420, %v2640
        %2645 = vst.msk [vmem:[%s12 + $0x10] sm:$0xff] %vm2420, %v2641
        %2646 = vst.msk [vmem:[%s12 + $0x18] sm:$0xff] %vm2420, %v2642
      $region76: #{_lambda_.1} parent=67 // pred_fallthru
        _
      // Predicated region
      $region77: #{_lambda_.1} parent=67 // pred_check
        %p2647 = pneg %p360
      $region78: #{_lambda_.1} parent=67 // pred_check_branch
        %2649 = sbr.rel (%p2647) target = $region80
      $region79: #{_lambda_.1} parent=67 // pred_region
        _
      $region80: #{_lambda_.1} parent=67 // pred_fallthru
        _
      // Predicated region
      $region81: #{_lambda_.1} parent=67 // pred_check
        %p2650 = pneg %p360
      $region82: #{_lambda_.1} parent=67 // pred_check_branch
        %2652 = sbr.rel (%p2650) target = $region84
      $region83: #{_lambda_.1} parent=67 // pred_region
        _
      $region84: #{_lambda_.1} parent=67 // pred_fallthru
        _
    $region68: #{_lambda_.1} parent=5 // pred_fallthru
      _
    %p2653 = scmp.le.s32.totalorder 2, %s18
    // Predicated region
    $region85: #{_lambda_.1} parent=5 // pred_check
      %p2654 = pneg %p2653
    $region86: #{_lambda_.1} parent=5 // pred_check_branch
      %2656 = sbr.rel (%p2654) target = $region88
    $region87: #{_lambda_.1} parent=5 // pred_region
      %s2657 = ssub.s32 %s18, 2
    $region88: #{_lambda_.1} parent=5 // pred_fallthru
      _
  $region6: #{_lambda_.1} parent=0 // loop_footer
    %s22 = sadd.s32 1, %s18
  $region7: #{_lambda_.1} parent=0 // loop_footer_branch
    %17 = sbr.rel target = $region3
  $region8: #{_lambda_.1} parent=0 // loop_exit
    _

</llo_original>
